<compile_context>
chip_gen: v6e
topology: v6e:2x2x1
jax: 0.10.0
libtpu: 0.0.40
codegen_flags: <defaults>
</compile_context>

<pallas_src>
import functools

import jax
import jax.numpy as jnp
from jax.experimental import pallas as pl
from jax.experimental.pallas import tpu as pltpu

NUM_CLASS = 5      # args.num_class
HIDDEN = 32        # config.hidden_size
VOCAB = 50
NUM_MODELS = 2     # len(args.model_name_or_path)
ALPHA_T = 0.5      # args.alpha_t
LN_EPS = 1e-5      # nn.LayerNorm default eps
BIAS_PACK = 128    # C + 3*(H+C) + C = 121 -> pad to one 128-lane row


def _vmem():
    return pl.BlockSpec(memory_space=pltpu.MemorySpace.VMEM)


# ----------------------------------------------------------------------------
# Single fused kernel: for each model m
#   start_logits = x @ Ws + bs
#   end_logits   = Linear(LayerNorm(tanh([x | onehot(start)] @ W0 + b0)))
# then per-model CE (ignore_index=-1, active tokens), ensemble-mean loss,
# ensemble-mean logits, and the 'reg' regularizer.
# ----------------------------------------------------------------------------
def fused_disti_kernel(xin_ref, wbig_ref, w1_ref, bias_ref, meta_ref,
                       loss_ref, se_ref, *, alpha_t, num_class, hidden):
    m_models, n, hc = xin_ref.shape                        # hc = H + C
    c = num_class

    meta = meta_ref[...]                                   # [N, 4] int32
    slbl = meta[:, 0:1]                                    # start labels
    elbl = meta[:, 1:2]                                    # end labels
    active = (meta[:, 2:3] == 1).astype(jnp.float32)       # attention_mask == 1
    tok = (meta[:, 3:4] != -1).astype(jnp.float32)         # token_label != -1

    iota_c = jax.lax.broadcasted_iota(jnp.int32, (n, c), 1)
    iota_hc = jax.lax.broadcasted_iota(jnp.int32, (n, hc), 1)

    # soft_label=True scatter: one-hot(start_positions) placed in the
    # [H, H+C) lane range.  Label-only, so hoisted out of the model loop.
    oh_start_pad = jnp.logical_and(
        iota_hc >= hidden, (iota_hc - hidden) == slbl).astype(jnp.float32)

    # CE bookkeeping, shared across models.
    oh_s = (iota_c == jnp.maximum(slbl, 0)).astype(jnp.float32)
    oh_e = (iota_c == jnp.maximum(elbl, 0)).astype(jnp.float32)
    valid_s = active * (slbl != -1).astype(jnp.float32)
    valid_e = active * (elbl != -1).astype(jnp.float32)
    inv_ns = 1.0 / jnp.maximum(jnp.sum(valid_s), 1.0)
    inv_ne = 1.0 / jnp.maximum(jnp.sum(valid_e), 1.0)

    def log_softmax(z):
        zm = z - jnp.max(z, axis=-1, keepdims=True)
        return zm - jnp.log(jnp.sum(jnp.exp(zm), axis=-1, keepdims=True))

    loss = jnp.float32(0.0)
    s_sum = jnp.zeros((n, c), jnp.float32)
    e_sum = jnp.zeros((n, c), jnp.float32)
    s_probs, e_probs = [], []

    for m in range(m_models):
        bias = bias_ref[m]                                 # [1, 128] packed
        bs = bias[:, 0:c]
        b0 = bias[:, c:c + hc]
        gamma = bias[:, c + hc:c + 2 * hc]
        beta = bias[:, c + 2 * hc:c + 3 * hc]
        b1 = bias[:, c + 3 * hc:c + 3 * hc + c]

        # One MXU pass per model covers all three x/one-hot contractions:
        # fused[:, :C] = x @ Ws, fused[:, C:] = x @ W0x + onehot @ W0o.
        xin = xin_ref[m] + oh_start_pad                    # [N, HC]
        fused = jnp.dot(xin, wbig_ref[m], preferred_element_type=jnp.float32)
        start_logits = fused[:, :c] + bs

        h0 = jnp.tanh(fused[:, c:] + b0)
        mu = jnp.mean(h0, axis=-1, keepdims=True)
        var = jnp.mean((h0 - mu) ** 2, axis=-1, keepdims=True)
        hn = (h0 - mu) * jax.lax.rsqrt(var + LN_EPS)
        hn = hn * gamma + beta
        end_logits = (jnp.dot(hn, w1_ref[m],
                              preferred_element_type=jnp.float32) + b1)

        s_sum = s_sum + start_logits
        e_sum = e_sum + end_logits

        s_lsm = log_softmax(start_logits)
        e_lsm = log_softmax(end_logits)
        s_ce = jnp.sum(-jnp.sum(s_lsm * oh_s, axis=-1, keepdims=True)
                       * valid_s) * inv_ns
        e_ce = jnp.sum(-jnp.sum(e_lsm * oh_e, axis=-1, keepdims=True)
                       * valid_e) * inv_ne
        loss = loss + 0.5 * (s_ce + e_ce)
        s_probs.append(jnp.exp(s_lsm))                     # softmax = exp(lsm)
        e_probs.append(jnp.exp(e_lsm))

    inv_m = 1.0 / m_models
    loss = loss * inv_m
    # Lane-contiguous [N, 2C] slab: [start_mean | end_mean]; split in wrapper.
    se_ref[...] = jnp.concatenate([s_sum, e_sum], axis=-1) * inv_m

    s_avg = sum(s_probs) * inv_m
    e_avg = sum(e_probs) * inv_m
    # TODO(synk): `distance_` is undefined in the source file; per-token squared
    # L2 distance between probability vectors is used here.
    s_reg = sum(jnp.sum((s_avg - p) ** 2, axis=-1, keepdims=True)
                for p in s_probs) * inv_m
    e_reg = sum(jnp.sum((e_avg - p) ** 2, axis=-1, keepdims=True)
                for p in e_probs) * inv_m
    reg = (s_reg + e_reg) * 0.5 * tok
    reg_loss = jnp.sum(reg) / (jnp.sum(tok) + 0.001)
    loss_ref[0, 0] = loss + alpha_t * reg_loss


# ----------------------------------------------------------------------------
# Parameter init (deterministic, synthetic).
# ----------------------------------------------------------------------------
def init_model_params(key, hidden=HIDDEN, num_class=NUM_CLASS, vocab=VOCAB):
    hc = hidden + num_class
    ks = jax.random.split(key, 5)
    s = 0.02
    return {
        "emb": jax.random.normal(ks[0], (vocab, hidden), jnp.float32) * s,
        "ws": jax.random.normal(ks[1], (hidden, num_class), jnp.float32) * s,
        "bs": jnp.zeros((1, num_class), jnp.float32),
        "w0x": jax.random.normal(ks[2], (hidden, hc), jnp.float32) * s,
        "w0o": jax.random.normal(ks[3], (num_class, hc), jnp.float32) * s,
        "b0": jnp.zeros((1, hc), jnp.float32),
        "gamma": jnp.ones((1, hc), jnp.float32),
        "beta": jnp.zeros((1, hc), jnp.float32),
        "w1": jax.random.normal(ks[4], (hc, num_class), jnp.float32) * s,
        "b1": jnp.zeros((1, num_class), jnp.float32),
    }


def _pack_params(params_list, num_class=NUM_CLASS, hidden=HIDDEN):
    """Per-model block weight wbig = [[Ws W0x]; [0 W0o]], w1, packed bias row."""
    hc = hidden + num_class
    wbig_l, w1_l, bias_l = [], [], []
    for p in params_list:
        top = jnp.concatenate([p["ws"], p["w0x"]], axis=1)          # [H, C+HC]
        bot = jnp.concatenate(
            [jnp.zeros((num_class, num_class), jnp.float32), p["w0o"]],
            axis=1)                                                 # [C, C+HC]
        wbig_l.append(jnp.concatenate([top, bot], axis=0))          # [HC, C+HC]
        w1_l.append(p["w1"])                                        # [HC, C]
        v = jnp.concatenate([p["bs"], p["b0"], p["gamma"], p["beta"], p["b1"]],
                            axis=1)                                 # [1, 2C+3HC]
        bias_l.append(jnp.pad(v, ((0, 0), (0, BIAS_PACK - v.shape[1]))))
    return (jnp.stack(wbig_l, axis=0), jnp.stack(w1_l, axis=0),
            jnp.stack(bias_l, axis=0))


# ----------------------------------------------------------------------------
# Create_model_disti.forward (training path: start/end positions provided).
# Returns (loss_out, start_logits_out, end_logits_out).
# ----------------------------------------------------------------------------
def create_model_disti_forward(params_list, input_ids, attention_mask,
                               token_label, start_positions, end_positions,
                               num_class=NUM_CLASS, hidden=HIDDEN,
                               alpha_t=ALPHA_T):
    b, s = input_ids.shape
    n = b * s
    hc = hidden + num_class
    ids = input_ids.reshape(n)

    # TODO(synk): HuggingFace AutoModel (BERT) backbone replaced by a
    # deterministic embedding lookup (nn.Dropout treated as identity); the
    # gather stays in JAX so the fused kernel receives [M, N, H+C] activations
    # (zero-padded by C lanes so the kernel can inject the one-hot in place).
    x_all = jnp.stack([p["emb"][ids] for p in params_list], axis=0)  # [M, N, H]
    x_all = jnp.pad(x_all, ((0, 0), (0, 0), (0, num_class)))         # [M, N, HC]

    wbig, w1, bias = _pack_params(params_list, num_class, hidden)

    meta = jnp.stack([start_positions.reshape(n),
                      end_positions.reshape(n),
                      attention_mask.reshape(n),
                      token_label.reshape(n)], axis=1).astype(jnp.int32)

    kernel = functools.partial(fused_disti_kernel, alpha_t=alpha_t,
                               num_class=num_class, hidden=hidden)
    loss, se = pl.pallas_call(
        kernel,
        out_shape=(jax.ShapeDtypeStruct((1, 1), jnp.float32),
                   jax.ShapeDtypeStruct((n, 2 * num_class), jnp.float32)),
        in_specs=[_vmem()] * 5,
        out_specs=(pl.BlockSpec(memory_space=pltpu.MemorySpace.SMEM), _vmem()),
    )(x_all, wbig, w1, bias, meta)

    s_out = se[:, :num_class].reshape(b, s, num_class)
    e_out = se[:, num_class:].reshape(b, s, num_class)
    return loss[0, 0], s_out, e_out


if __name__ == "__main__":
    key = jax.random.PRNGKey(0)
    keys = jax.random.split(key, 4 + NUM_MODELS)
    k_ids, k_tok, k_sp, k_ep = keys[:4]
    pkeys = keys[4:]

    B, S = 2, 8
    input_ids = jax.random.randint(k_ids, (B, S), 0, VOCAB, dtype=jnp.int32)
    attention_mask = jnp.ones((B, S), jnp.int32).at[:, -2:].set(0)
    token_label = jax.random.randint(k_tok, (B, S), -1, NUM_CLASS, dtype=jnp.int32)
    start_positions = jax.random.randint(k_sp, (B, S), 0, NUM_CLASS, dtype=jnp.int32)
    end_positions = jax.random.randint(k_ep, (B, S), 0, NUM_CLASS, dtype=jnp.int32)

    params_list = [init_model_params(pk) for pk in pkeys]

    fwd = jax.jit(create_model_disti_forward)
    loss, s_out, e_out = fwd(params_list, input_ids, attention_mask,
                             token_label, start_positions, end_positions)
    jax.block_until_ready((loss, s_out, e_out))
    assert s_out.shape == (B, S, NUM_CLASS) and e_out.shape == (B, S, NUM_CLASS)
    assert jnp.isfinite(loss)
    assert bool(jnp.all(jnp.isfinite(s_out))) and bool(jnp.all(jnp.isfinite(e_out)))
    print("KERNEL_OK")
</pallas_src>

<mosaic_0001>
module attributes {stable_mosaic.version = 11 : i64} {
  func.func @fused_disti_kernel(%arg0: memref<2x16x37xf32, #tpu.memory_space<vmem>>, %arg1: memref<2x37x42xf32, #tpu.memory_space<vmem>>, %arg2: memref<2x37x5xf32, #tpu.memory_space<vmem>>, %arg3: memref<2x1x128xf32, #tpu.memory_space<vmem>>, %arg4: memref<16x4xi32, #tpu.memory_space<vmem>>, %arg5: memref<1x1xf32, #tpu.memory_space<smem>>, %arg6: memref<16x10xf32, #tpu.memory_space<vmem>>) attributes {dimension_semantics = [], scalar_prefetch = 0 : i64, scratch_operands = 0 : i64, tpu.core_type = #tpu.core_type<tc>} {
    %c0 = arith.constant 0 : index
    %c0_0 = arith.constant 0 : index
    %0 = vector.load %arg4[%c0, %c0_0] : memref<16x4xi32, #tpu.memory_space<vmem>>, vector<16x4xi32>
    %1 = vector.extract_strided_slice %0 {offsets = [0, 0], sizes = [16, 1], strides = [1, 1]} : vector<16x4xi32> to vector<16x1xi32>
    %2 = vector.extract_strided_slice %0 {offsets = [0, 1], sizes = [16, 1], strides = [1, 1]} : vector<16x4xi32> to vector<16x1xi32>
    %3 = vector.extract_strided_slice %0 {offsets = [0, 2], sizes = [16, 1], strides = [1, 1]} : vector<16x4xi32> to vector<16x1xi32>
    %c1_i32 = arith.constant 1 : i32
    %4 = vector.broadcast %c1_i32 : i32 to vector<16x1xi32>
    %5 = arith.cmpi eq, %3, %4 : vector<16x1xi32>
    %6 = arith.extui %5 : vector<16x1xi1> to vector<16x1xi32>
    %7 = arith.sitofp %6 : vector<16x1xi32> to vector<16x1xf32>
    %8 = vector.extract_strided_slice %0 {offsets = [0, 3], sizes = [16, 1], strides = [1, 1]} : vector<16x4xi32> to vector<16x1xi32>
    %c-1_i32 = arith.constant -1 : i32
    %9 = vector.broadcast %c-1_i32 : i32 to vector<16x1xi32>
    %10 = arith.cmpi ne, %8, %9 : vector<16x1xi32>
    %11 = arith.extui %10 : vector<16x1xi1> to vector<16x1xi32>
    %12 = arith.sitofp %11 : vector<16x1xi32> to vector<16x1xf32>
    %13 = tpu.iota {dimensions = array<i32: 1>} : vector<16x5xi32>
    %14 = tpu.iota {dimensions = array<i32: 1>} : vector<16x37xi32>
    %c32_i32 = arith.constant 32 : i32
    %15 = vector.broadcast %c32_i32 : i32 to vector<16x37xi32>
    %16 = arith.cmpi sge, %14, %15 : vector<16x37xi32>
    %c32_i32_1 = arith.constant 32 : i32
    %17 = vector.broadcast %c32_i32_1 : i32 to vector<16x37xi32>
    %18 = arith.subi %14, %17 : vector<16x37xi32>
    %19 = vector.broadcast %1 : vector<16x1xi32> to vector<16x37xi32>
    %20 = arith.cmpi eq, %18, %19 : vector<16x37xi32>
    %21 = arith.andi %16, %20 : vector<16x37xi1>
    %22 = arith.extui %21 : vector<16x37xi1> to vector<16x37xi32>
    %23 = arith.sitofp %22 : vector<16x37xi32> to vector<16x37xf32>
    %c0_i32 = arith.constant 0 : i32
    %24 = vector.broadcast %c0_i32 : i32 to vector<16x1xi32>
    %25 = arith.maxsi %1, %24 : vector<16x1xi32>
    %26 = vector.broadcast %25 : vector<16x1xi32> to vector<16x5xi32>
    %27 = arith.cmpi eq, %13, %26 : vector<16x5xi32>
    %28 = arith.extui %27 : vector<16x5xi1> to vector<16x5xi32>
    %29 = arith.sitofp %28 : vector<16x5xi32> to vector<16x5xf32>
    %c0_i32_2 = arith.constant 0 : i32
    %30 = vector.broadcast %c0_i32_2 : i32 to vector<16x1xi32>
    %31 = arith.maxsi %2, %30 : vector<16x1xi32>
    %32 = vector.broadcast %31 : vector<16x1xi32> to vector<16x5xi32>
    %33 = arith.cmpi eq, %13, %32 : vector<16x5xi32>
    %34 = arith.extui %33 : vector<16x5xi1> to vector<16x5xi32>
    %35 = arith.sitofp %34 : vector<16x5xi32> to vector<16x5xf32>
    %c-1_i32_3 = arith.constant -1 : i32
    %36 = vector.broadcast %c-1_i32_3 : i32 to vector<16x1xi32>
    %37 = arith.cmpi ne, %1, %36 : vector<16x1xi32>
    %38 = arith.extui %37 : vector<16x1xi1> to vector<16x1xi32>
    %39 = arith.sitofp %38 : vector<16x1xi32> to vector<16x1xf32>
    %40 = arith.mulf %7, %39 : vector<16x1xf32>
    %c-1_i32_4 = arith.constant -1 : i32
    %41 = vector.broadcast %c-1_i32_4 : i32 to vector<16x1xi32>
    %42 = arith.cmpi ne, %2, %41 : vector<16x1xi32>
    %43 = arith.extui %42 : vector<16x1xi1> to vector<16x1xi32>
    %44 = arith.sitofp %43 : vector<16x1xi32> to vector<16x1xf32>
    %45 = arith.mulf %7, %44 : vector<16x1xf32>
    %46 = vector.shape_cast %40 : vector<16x1xf32> to vector<1x16x1xf32>
    %cst = arith.constant dense<0.000000e+00> : vector<1xf32>
    %47 = vector.multi_reduction <add>, %46, %cst [1, 2] : vector<1x16x1xf32> to vector<1xf32>
    %48 = vector.shape_cast %47 : vector<1xf32> to vector<1x1x1xf32>
    %49 = vector.extract %48[0, 0, 0] : f32 from vector<1x1x1xf32>
    %cst_5 = arith.constant 1.000000e+00 : f32
    %50 = arith.maximumf %49, %cst_5 : f32
    %cst_6 = arith.constant 1.000000e+00 : f32
    %51 = arith.divf %cst_6, %50 : f32
    %52 = vector.shape_cast %45 : vector<16x1xf32> to vector<1x16x1xf32>
    %cst_7 = arith.constant dense<0.000000e+00> : vector<1xf32>
    %53 = vector.multi_reduction <add>, %52, %cst_7 [1, 2] : vector<1x16x1xf32> to vector<1xf32>
    %54 = vector.shape_cast %53 : vector<1xf32> to vector<1x1x1xf32>
    %55 = vector.extract %54[0, 0, 0] : f32 from vector<1x1x1xf32>
    %cst_8 = arith.constant 1.000000e+00 : f32
    %56 = arith.maximumf %55, %cst_8 : f32
    %cst_9 = arith.constant 1.000000e+00 : f32
    %57 = arith.divf %cst_9, %56 : f32
    %cst_10 = arith.constant 0.000000e+00 : f32
    %58 = vector.broadcast %cst_10 : f32 to vector<16x5xf32>
    %cst_11 = arith.constant 0.000000e+00 : f32
    %59 = vector.broadcast %cst_11 : f32 to vector<16x5xf32>
    %c0_12 = arith.constant 0 : index
    %c0_13 = arith.constant 0 : index
    %c0_14 = arith.constant 0 : index
    %60 = vector.load %arg3[%c0_12, %c0_13, %c0_14] : memref<2x1x128xf32, #tpu.memory_space<vmem>>, vector<1x1x128xf32>
    %61 = vector.shape_cast %60 : vector<1x1x128xf32> to vector<1x128xf32>
    %62 = vector.extract_strided_slice %61 {offsets = [0, 0], sizes = [1, 5], strides = [1, 1]} : vector<1x128xf32> to vector<1x5xf32>
    %63 = vector.extract_strided_slice %61 {offsets = [0, 5], sizes = [1, 37], strides = [1, 1]} : vector<1x128xf32> to vector<1x37xf32>
    %64 = vector.extract_strided_slice %61 {offsets = [0, 42], sizes = [1, 37], strides = [1, 1]} : vector<1x128xf32> to vector<1x37xf32>
    %65 = vector.extract_strided_slice %61 {offsets = [0, 79], sizes = [1, 37], strides = [1, 1]} : vector<1x128xf32> to vector<1x37xf32>
    %66 = vector.extract_strided_slice %61 {offsets = [0, 116], sizes = [1, 5], strides = [1, 1]} : vector<1x128xf32> to vector<1x5xf32>
    %c0_15 = arith.constant 0 : index
    %c0_16 = arith.constant 0 : index
    %c0_17 = arith.constant 0 : index
    %67 = vector.load %arg0[%c0_15, %c0_16, %c0_17] : memref<2x16x37xf32, #tpu.memory_space<vmem>>, vector<1x16x37xf32>
    %68 = vector.shape_cast %67 : vector<1x16x37xf32> to vector<16x37xf32>
    %69 = arith.addf %68, %23 : vector<16x37xf32>
    %c0_18 = arith.constant 0 : index
    %c0_19 = arith.constant 0 : index
    %c0_20 = arith.constant 0 : index
    %70 = vector.load %arg1[%c0_18, %c0_19, %c0_20] : memref<2x37x42xf32, #tpu.memory_space<vmem>>, vector<1x37x42xf32>
    %71 = vector.shape_cast %70 : vector<1x37x42xf32> to vector<37x42xf32>
    %cst_21 = arith.constant dense<0.000000e+00> : vector<16x42xf32>
    %72 = tpu.matmul %69, %71, %cst_21 {dimension_numbers = #tpu.dot_dimension_numbers<[1], [0], [0], [1], [0, 0, 1, 1], [], []>} : vector<16x37xf32>, vector<37x42xf32>, vector<16x42xf32> -> vector<16x42xf32>
    %73 = vector.extract_strided_slice %72 {offsets = [0, 0], sizes = [16, 5], strides = [1, 1]} : vector<16x42xf32> to vector<16x5xf32>
    %74 = vector.broadcast %62 : vector<1x5xf32> to vector<16x5xf32>
    %75 = arith.addf %73, %74 : vector<16x5xf32>
    %76 = vector.extract_strided_slice %72 {offsets = [0, 5], sizes = [16, 37], strides = [1, 1]} : vector<16x42xf32> to vector<16x37xf32>
    %77 = vector.broadcast %63 : vector<1x37xf32> to vector<16x37xf32>
    %78 = arith.addf %76, %77 : vector<16x37xf32>
    %79 = math.tanh %78 : vector<16x37xf32>
    %cst_22 = arith.constant dense<0.000000e+00> : vector<16xf32>
    %80 = vector.multi_reduction <add>, %79, %cst_22 [1] : vector<16x37xf32> to vector<16xf32>
    %81 = vector.shape_cast %80 : vector<16xf32> to vector<16x1xf32>
    %cst_23 = arith.constant 3.700000e+01 : f32
    %82 = vector.broadcast %cst_23 : f32 to vector<16x1xf32>
    %83 = arith.divf %81, %82 : vector<16x1xf32>
    %84 = vector.broadcast %83 : vector<16x1xf32> to vector<16x37xf32>
    %85 = arith.subf %79, %84 : vector<16x37xf32>
    %86 = arith.mulf %85, %85 : vector<16x37xf32>
    %cst_24 = arith.constant dense<0.000000e+00> : vector<16xf32>
    %87 = vector.multi_reduction <add>, %86, %cst_24 [1] : vector<16x37xf32> to vector<16xf32>
    %88 = vector.shape_cast %87 : vector<16xf32> to vector<16x1xf32>
    %cst_25 = arith.constant 3.700000e+01 : f32
    %89 = vector.broadcast %cst_25 : f32 to vector<16x1xf32>
    %90 = arith.divf %88, %89 : vector<16x1xf32>
    %91 = vector.broadcast %83 : vector<16x1xf32> to vector<16x37xf32>
    %92 = arith.subf %79, %91 : vector<16x37xf32>
    %cst_26 = arith.constant 9.99999974E-6 : f32
    %93 = vector.broadcast %cst_26 : f32 to vector<16x1xf32>
    %94 = arith.addf %90, %93 : vector<16x1xf32>
    %95 = math.rsqrt %94 : vector<16x1xf32>
    %96 = vector.broadcast %95 : vector<16x1xf32> to vector<16x37xf32>
    %97 = arith.mulf %92, %96 : vector<16x37xf32>
    %98 = vector.broadcast %64 : vector<1x37xf32> to vector<16x37xf32>
    %99 = arith.mulf %97, %98 : vector<16x37xf32>
    %100 = vector.broadcast %65 : vector<1x37xf32> to vector<16x37xf32>
    %101 = arith.addf %99, %100 : vector<16x37xf32>
    %c0_27 = arith.constant 0 : index
    %c0_28 = arith.constant 0 : index
    %c0_29 = arith.constant 0 : index
    %102 = vector.load %arg2[%c0_27, %c0_28, %c0_29] : memref<2x37x5xf32, #tpu.memory_space<vmem>>, vector<1x37x5xf32>
    %103 = vector.shape_cast %102 : vector<1x37x5xf32> to vector<37x5xf32>
    %cst_30 = arith.constant dense<0.000000e+00> : vector<16x5xf32>
    %104 = tpu.matmul %101, %103, %cst_30 {dimension_numbers = #tpu.dot_dimension_numbers<[1], [0], [0], [1], [0, 0, 1, 1], [], []>} : vector<16x37xf32>, vector<37x5xf32>, vector<16x5xf32> -> vector<16x5xf32>
    %105 = vector.broadcast %66 : vector<1x5xf32> to vector<16x5xf32>
    %106 = arith.addf %104, %105 : vector<16x5xf32>
    %107 = arith.addf %58, %75 : vector<16x5xf32>
    %108 = arith.addf %59, %106 : vector<16x5xf32>
    %cst_31 = arith.constant dense<0xFF800000> : vector<16xf32>
    %109 = vector.multi_reduction <maximumf>, %75, %cst_31 [1] : vector<16x5xf32> to vector<16xf32>
    %110 = vector.shape_cast %109 : vector<16xf32> to vector<16x1xf32>
    %111 = vector.broadcast %110 : vector<16x1xf32> to vector<16x5xf32>
    %112 = arith.subf %75, %111 : vector<16x5xf32>
    %113 = math.exp %112 : vector<16x5xf32>
    %cst_32 = arith.constant dense<0.000000e+00> : vector<16xf32>
    %114 = vector.multi_reduction <add>, %113, %cst_32 [1] : vector<16x5xf32> to vector<16xf32>
    %115 = vector.shape_cast %114 : vector<16xf32> to vector<16x1xf32>
    %116 = math.log %115 : vector<16x1xf32>
    %117 = vector.broadcast %116 : vector<16x1xf32> to vector<16x5xf32>
    %118 = arith.subf %112, %117 : vector<16x5xf32>
    %cst_33 = arith.constant dense<0xFF800000> : vector<16xf32>
    %119 = vector.multi_reduction <maximumf>, %106, %cst_33 [1] : vector<16x5xf32> to vector<16xf32>
    %120 = vector.shape_cast %119 : vector<16xf32> to vector<16x1xf32>
    %121 = vector.broadcast %120 : vector<16x1xf32> to vector<16x5xf32>
    %122 = arith.subf %106, %121 : vector<16x5xf32>
    %123 = math.exp %122 : vector<16x5xf32>
    %cst_34 = arith.constant dense<0.000000e+00> : vector<16xf32>
    %124 = vector.multi_reduction <add>, %123, %cst_34 [1] : vector<16x5xf32> to vector<16xf32>
    %125 = vector.shape_cast %124 : vector<16xf32> to vector<16x1xf32>
    %126 = math.log %125 : vector<16x1xf32>
    %127 = vector.broadcast %126 : vector<16x1xf32> to vector<16x5xf32>
    %128 = arith.subf %122, %127 : vector<16x5xf32>
    %129 = arith.mulf %118, %29 : vector<16x5xf32>
    %cst_35 = arith.constant dense<0.000000e+00> : vector<16xf32>
    %130 = vector.multi_reduction <add>, %129, %cst_35 [1] : vector<16x5xf32> to vector<16xf32>
    %131 = vector.shape_cast %130 : vector<16xf32> to vector<16x1xf32>
    %cst_36 = arith.constant 0.000000e+00 : f32
    %132 = vector.broadcast %cst_36 : f32 to vector<16x1xf32>
    %133 = arith.subf %132, %131 : vector<16x1xf32>
    %134 = arith.mulf %133, %40 : vector<16x1xf32>
    %135 = vector.shape_cast %134 : vector<16x1xf32> to vector<1x16x1xf32>
    %cst_37 = arith.constant dense<0.000000e+00> : vector<1xf32>
    %136 = vector.multi_reduction <add>, %135, %cst_37 [1, 2] : vector<1x16x1xf32> to vector<1xf32>
    %137 = vector.shape_cast %136 : vector<1xf32> to vector<1x1x1xf32>
    %138 = vector.extract %137[0, 0, 0] : f32 from vector<1x1x1xf32>
    %139 = arith.mulf %138, %51 : f32
    %140 = arith.mulf %128, %35 : vector<16x5xf32>
    %cst_38 = arith.constant dense<0.000000e+00> : vector<16xf32>
    %141 = vector.multi_reduction <add>, %140, %cst_38 [1] : vector<16x5xf32> to vector<16xf32>
    %142 = vector.shape_cast %141 : vector<16xf32> to vector<16x1xf32>
    %cst_39 = arith.constant 0.000000e+00 : f32
    %143 = vector.broadcast %cst_39 : f32 to vector<16x1xf32>
    %144 = arith.subf %143, %142 : vector<16x1xf32>
    %145 = arith.mulf %144, %45 : vector<16x1xf32>
    %146 = vector.shape_cast %145 : vector<16x1xf32> to vector<1x16x1xf32>
    %cst_40 = arith.constant dense<0.000000e+00> : vector<1xf32>
    %147 = vector.multi_reduction <add>, %146, %cst_40 [1, 2] : vector<1x16x1xf32> to vector<1xf32>
    %148 = vector.shape_cast %147 : vector<1xf32> to vector<1x1x1xf32>
    %149 = vector.extract %148[0, 0, 0] : f32 from vector<1x1x1xf32>
    %150 = arith.mulf %149, %57 : f32
    %151 = arith.addf %139, %150 : f32
    %cst_41 = arith.constant 5.000000e-01 : f32
    %152 = arith.mulf %cst_41, %151 : f32
    %cst_42 = arith.constant 0.000000e+00 : f32
    %153 = arith.addf %cst_42, %152 : f32
    %154 = math.exp %118 : vector<16x5xf32>
    %155 = math.exp %128 : vector<16x5xf32>
    %c1 = arith.constant 1 : index
    %c0_43 = arith.constant 0 : index
    %c0_44 = arith.constant 0 : index
    %156 = vector.load %arg3[%c1, %c0_43, %c0_44] : memref<2x1x128xf32, #tpu.memory_space<vmem>>, vector<1x1x128xf32>
    %157 = vector.shape_cast %156 : vector<1x1x128xf32> to vector<1x128xf32>
    %158 = vector.extract_strided_slice %157 {offsets = [0, 0], sizes = [1, 5], strides = [1, 1]} : vector<1x128xf32> to vector<1x5xf32>
    %159 = vector.extract_strided_slice %157 {offsets = [0, 5], sizes = [1, 37], strides = [1, 1]} : vector<1x128xf32> to vector<1x37xf32>
    %160 = vector.extract_strided_slice %157 {offsets = [0, 42], sizes = [1, 37], strides = [1, 1]} : vector<1x128xf32> to vector<1x37xf32>
    %161 = vector.extract_strided_slice %157 {offsets = [0, 79], sizes = [1, 37], strides = [1, 1]} : vector<1x128xf32> to vector<1x37xf32>
    %162 = vector.extract_strided_slice %157 {offsets = [0, 116], sizes = [1, 5], strides = [1, 1]} : vector<1x128xf32> to vector<1x5xf32>
    %c1_45 = arith.constant 1 : index
    %c0_46 = arith.constant 0 : index
    %c0_47 = arith.constant 0 : index
    %163 = vector.load %arg0[%c1_45, %c0_46, %c0_47] : memref<2x16x37xf32, #tpu.memory_space<vmem>>, vector<1x16x37xf32>
    %164 = vector.shape_cast %163 : vector<1x16x37xf32> to vector<16x37xf32>
    %165 = arith.addf %164, %23 : vector<16x37xf32>
    %c1_48 = arith.constant 1 : index
    %c0_49 = arith.constant 0 : index
    %c0_50 = arith.constant 0 : index
    %166 = vector.load %arg1[%c1_48, %c0_49, %c0_50] : memref<2x37x42xf32, #tpu.memory_space<vmem>>, vector<1x37x42xf32>
    %167 = vector.shape_cast %166 : vector<1x37x42xf32> to vector<37x42xf32>
    %cst_51 = arith.constant dense<0.000000e+00> : vector<16x42xf32>
    %168 = tpu.matmul %165, %167, %cst_51 {dimension_numbers = #tpu.dot_dimension_numbers<[1], [0], [0], [1], [0, 0, 1, 1], [], []>} : vector<16x37xf32>, vector<37x42xf32>, vector<16x42xf32> -> vector<16x42xf32>
    %169 = vector.extract_strided_slice %168 {offsets = [0, 0], sizes = [16, 5], strides = [1, 1]} : vector<16x42xf32> to vector<16x5xf32>
    %170 = vector.broadcast %158 : vector<1x5xf32> to vector<16x5xf32>
    %171 = arith.addf %169, %170 : vector<16x5xf32>
    %172 = vector.extract_strided_slice %168 {offsets = [0, 5], sizes = [16, 37], strides = [1, 1]} : vector<16x42xf32> to vector<16x37xf32>
    %173 = vector.broadcast %159 : vector<1x37xf32> to vector<16x37xf32>
    %174 = arith.addf %172, %173 : vector<16x37xf32>
    %175 = math.tanh %174 : vector<16x37xf32>
    %cst_52 = arith.constant dense<0.000000e+00> : vector<16xf32>
    %176 = vector.multi_reduction <add>, %175, %cst_52 [1] : vector<16x37xf32> to vector<16xf32>
    %177 = vector.shape_cast %176 : vector<16xf32> to vector<16x1xf32>
    %cst_53 = arith.constant 3.700000e+01 : f32
    %178 = vector.broadcast %cst_53 : f32 to vector<16x1xf32>
    %179 = arith.divf %177, %178 : vector<16x1xf32>
    %180 = vector.broadcast %179 : vector<16x1xf32> to vector<16x37xf32>
    %181 = arith.subf %175, %180 : vector<16x37xf32>
    %182 = arith.mulf %181, %181 : vector<16x37xf32>
    %cst_54 = arith.constant dense<0.000000e+00> : vector<16xf32>
    %183 = vector.multi_reduction <add>, %182, %cst_54 [1] : vector<16x37xf32> to vector<16xf32>
    %184 = vector.shape_cast %183 : vector<16xf32> to vector<16x1xf32>
    %cst_55 = arith.constant 3.700000e+01 : f32
    %185 = vector.broadcast %cst_55 : f32 to vector<16x1xf32>
    %186 = arith.divf %184, %185 : vector<16x1xf32>
    %187 = vector.broadcast %179 : vector<16x1xf32> to vector<16x37xf32>
    %188 = arith.subf %175, %187 : vector<16x37xf32>
    %cst_56 = arith.constant 9.99999974E-6 : f32
    %189 = vector.broadcast %cst_56 : f32 to vector<16x1xf32>
    %190 = arith.addf %186, %189 : vector<16x1xf32>
    %191 = math.rsqrt %190 : vector<16x1xf32>
    %192 = vector.broadcast %191 : vector<16x1xf32> to vector<16x37xf32>
    %193 = arith.mulf %188, %192 : vector<16x37xf32>
    %194 = vector.broadcast %160 : vector<1x37xf32> to vector<16x37xf32>
    %195 = arith.mulf %193, %194 : vector<16x37xf32>
    %196 = vector.broadcast %161 : vector<1x37xf32> to vector<16x37xf32>
    %197 = arith.addf %195, %196 : vector<16x37xf32>
    %c1_57 = arith.constant 1 : index
    %c0_58 = arith.constant 0 : index
    %c0_59 = arith.constant 0 : index
    %198 = vector.load %arg2[%c1_57, %c0_58, %c0_59] : memref<2x37x5xf32, #tpu.memory_space<vmem>>, vector<1x37x5xf32>
    %199 = vector.shape_cast %198 : vector<1x37x5xf32> to vector<37x5xf32>
    %cst_60 = arith.constant dense<0.000000e+00> : vector<16x5xf32>
    %200 = tpu.matmul %197, %199, %cst_60 {dimension_numbers = #tpu.dot_dimension_numbers<[1], [0], [0], [1], [0, 0, 1, 1], [], []>} : vector<16x37xf32>, vector<37x5xf32>, vector<16x5xf32> -> vector<16x5xf32>
    %201 = vector.broadcast %162 : vector<1x5xf32> to vector<16x5xf32>
    %202 = arith.addf %200, %201 : vector<16x5xf32>
    %203 = arith.addf %107, %171 : vector<16x5xf32>
    %204 = arith.addf %108, %202 : vector<16x5xf32>
    %cst_61 = arith.constant dense<0xFF800000> : vector<16xf32>
    %205 = vector.multi_reduction <maximumf>, %171, %cst_61 [1] : vector<16x5xf32> to vector<16xf32>
    %206 = vector.shape_cast %205 : vector<16xf32> to vector<16x1xf32>
    %207 = vector.broadcast %206 : vector<16x1xf32> to vector<16x5xf32>
    %208 = arith.subf %171, %207 : vector<16x5xf32>
    %209 = math.exp %208 : vector<16x5xf32>
    %cst_62 = arith.constant dense<0.000000e+00> : vector<16xf32>
    %210 = vector.multi_reduction <add>, %209, %cst_62 [1] : vector<16x5xf32> to vector<16xf32>
    %211 = vector.shape_cast %210 : vector<16xf32> to vector<16x1xf32>
    %212 = math.log %211 : vector<16x1xf32>
    %213 = vector.broadcast %212 : vector<16x1xf32> to vector<16x5xf32>
    %214 = arith.subf %208, %213 : vector<16x5xf32>
    %cst_63 = arith.constant dense<0xFF800000> : vector<16xf32>
    %215 = vector.multi_reduction <maximumf>, %202, %cst_63 [1] : vector<16x5xf32> to vector<16xf32>
    %216 = vector.shape_cast %215 : vector<16xf32> to vector<16x1xf32>
    %217 = vector.broadcast %216 : vector<16x1xf32> to vector<16x5xf32>
    %218 = arith.subf %202, %217 : vector<16x5xf32>
    %219 = math.exp %218 : vector<16x5xf32>
    %cst_64 = arith.constant dense<0.000000e+00> : vector<16xf32>
    %220 = vector.multi_reduction <add>, %219, %cst_64 [1] : vector<16x5xf32> to vector<16xf32>
    %221 = vector.shape_cast %220 : vector<16xf32> to vector<16x1xf32>
    %222 = math.log %221 : vector<16x1xf32>
    %223 = vector.broadcast %222 : vector<16x1xf32> to vector<16x5xf32>
    %224 = arith.subf %218, %223 : vector<16x5xf32>
    %225 = arith.mulf %214, %29 : vector<16x5xf32>
    %cst_65 = arith.constant dense<0.000000e+00> : vector<16xf32>
    %226 = vector.multi_reduction <add>, %225, %cst_65 [1] : vector<16x5xf32> to vector<16xf32>
    %227 = vector.shape_cast %226 : vector<16xf32> to vector<16x1xf32>
    %cst_66 = arith.constant 0.000000e+00 : f32
    %228 = vector.broadcast %cst_66 : f32 to vector<16x1xf32>
    %229 = arith.subf %228, %227 : vector<16x1xf32>
    %230 = arith.mulf %229, %40 : vector<16x1xf32>
    %231 = vector.shape_cast %230 : vector<16x1xf32> to vector<1x16x1xf32>
    %cst_67 = arith.constant dense<0.000000e+00> : vector<1xf32>
    %232 = vector.multi_reduction <add>, %231, %cst_67 [1, 2] : vector<1x16x1xf32> to vector<1xf32>
    %233 = vector.shape_cast %232 : vector<1xf32> to vector<1x1x1xf32>
    %234 = vector.extract %233[0, 0, 0] : f32 from vector<1x1x1xf32>
    %235 = arith.mulf %234, %51 : f32
    %236 = arith.mulf %224, %35 : vector<16x5xf32>
    %cst_68 = arith.constant dense<0.000000e+00> : vector<16xf32>
    %237 = vector.multi_reduction <add>, %236, %cst_68 [1] : vector<16x5xf32> to vector<16xf32>
    %238 = vector.shape_cast %237 : vector<16xf32> to vector<16x1xf32>
    %cst_69 = arith.constant 0.000000e+00 : f32
    %239 = vector.broadcast %cst_69 : f32 to vector<16x1xf32>
    %240 = arith.subf %239, %238 : vector<16x1xf32>
    %241 = arith.mulf %240, %45 : vector<16x1xf32>
    %242 = vector.shape_cast %241 : vector<16x1xf32> to vector<1x16x1xf32>
    %cst_70 = arith.constant dense<0.000000e+00> : vector<1xf32>
    %243 = vector.multi_reduction <add>, %242, %cst_70 [1, 2] : vector<1x16x1xf32> to vector<1xf32>
    %244 = vector.shape_cast %243 : vector<1xf32> to vector<1x1x1xf32>
    %245 = vector.extract %244[0, 0, 0] : f32 from vector<1x1x1xf32>
    %246 = arith.mulf %245, %57 : f32
    %247 = arith.addf %235, %246 : f32
    %cst_71 = arith.constant 5.000000e-01 : f32
    %248 = arith.mulf %cst_71, %247 : f32
    %249 = arith.addf %153, %248 : f32
    %250 = math.exp %214 : vector<16x5xf32>
    %251 = math.exp %224 : vector<16x5xf32>
    %cst_72 = arith.constant 5.000000e-01 : f32
    %252 = arith.mulf %249, %cst_72 : f32
    %253 = tpu.concatenate %203, %204 in 1 : vector<16x5xf32>, vector<16x5xf32> -> vector<16x10xf32>
    %cst_73 = arith.constant 5.000000e-01 : f32
    %254 = vector.broadcast %cst_73 : f32 to vector<16x10xf32>
    %255 = arith.mulf %253, %254 : vector<16x10xf32>
    %c0_74 = arith.constant 0 : index
    %c0_75 = arith.constant 0 : index
    %256 = vector.load %arg6[%c0_74, %c0_75] : memref<16x10xf32, #tpu.memory_space<vmem>>, vector<16x10xf32>
    tpu.vector_store %arg6[%c0_74, %c0_75], %255 {strides = array<i32>} : memref<16x10xf32, #tpu.memory_space<vmem>>, vector<16x10xf32>,
    %cst_76 = arith.constant 0.000000e+00 : f32
    %257 = vector.broadcast %cst_76 : f32 to vector<16x5xf32>
    %258 = arith.addf %257, %154 : vector<16x5xf32>
    %259 = arith.addf %258, %250 : vector<16x5xf32>
    %cst_77 = arith.constant 5.000000e-01 : f32
    %260 = vector.broadcast %cst_77 : f32 to vector<16x5xf32>
    %261 = arith.mulf %259, %260 : vector<16x5xf32>
    %cst_78 = arith.constant 0.000000e+00 : f32
    %262 = vector.broadcast %cst_78 : f32 to vector<16x5xf32>
    %263 = arith.addf %262, %155 : vector<16x5xf32>
    %264 = arith.addf %263, %251 : vector<16x5xf32>
    %cst_79 = arith.constant 5.000000e-01 : f32
    %265 = vector.broadcast %cst_79 : f32 to vector<16x5xf32>
    %266 = arith.mulf %264, %265 : vector<16x5xf32>
    %267 = arith.subf %261, %154 : vector<16x5xf32>
    %268 = arith.mulf %267, %267 : vector<16x5xf32>
    %cst_80 = arith.constant dense<0.000000e+00> : vector<16xf32>
    %269 = vector.multi_reduction <add>, %268, %cst_80 [1] : vector<16x5xf32> to vector<16xf32>
    %270 = vector.shape_cast %269 : vector<16xf32> to vector<16x1xf32>
    %cst_81 = arith.constant 0.000000e+00 : f32
    %271 = vector.broadcast %cst_81 : f32 to vector<16x1xf32>
    %272 = arith.addf %271, %270 : vector<16x1xf32>
    %273 = arith.subf %261, %250 : vector<16x5xf32>
    %274 = arith.mulf %273, %273 : vector<16x5xf32>
    %cst_82 = arith.constant dense<0.000000e+00> : vector<16xf32>
    %275 = vector.multi_reduction <add>, %274, %cst_82 [1] : vector<16x5xf32> to vector<16xf32>
    %276 = vector.shape_cast %275 : vector<16xf32> to vector<16x1xf32>
    %277 = arith.addf %272, %276 : vector<16x1xf32>
    %cst_83 = arith.constant 5.000000e-01 : f32
    %278 = vector.broadcast %cst_83 : f32 to vector<16x1xf32>
    %279 = arith.mulf %277, %278 : vector<16x1xf32>
    %280 = arith.subf %266, %155 : vector<16x5xf32>
    %281 = arith.mulf %280, %280 : vector<16x5xf32>
    %cst_84 = arith.constant dense<0.000000e+00> : vector<16xf32>
    %282 = vector.multi_reduction <add>, %281, %cst_84 [1] : vector<16x5xf32> to vector<16xf32>
    %283 = vector.shape_cast %282 : vector<16xf32> to vector<16x1xf32>
    %cst_85 = arith.constant 0.000000e+00 : f32
    %284 = vector.broadcast %cst_85 : f32 to vector<16x1xf32>
    %285 = arith.addf %284, %283 : vector<16x1xf32>
    %286 = arith.subf %266, %251 : vector<16x5xf32>
    %287 = arith.mulf %286, %286 : vector<16x5xf32>
    %cst_86 = arith.constant dense<0.000000e+00> : vector<16xf32>
    %288 = vector.multi_reduction <add>, %287, %cst_86 [1] : vector<16x5xf32> to vector<16xf32>
    %289 = vector.shape_cast %288 : vector<16xf32> to vector<16x1xf32>
    %290 = arith.addf %285, %289 : vector<16x1xf32>
    %cst_87 = arith.constant 5.000000e-01 : f32
    %291 = vector.broadcast %cst_87 : f32 to vector<16x1xf32>
    %292 = arith.mulf %290, %291 : vector<16x1xf32>
    %293 = arith.addf %279, %292 : vector<16x1xf32>
    %cst_88 = arith.constant 5.000000e-01 : f32
    %294 = vector.broadcast %cst_88 : f32 to vector<16x1xf32>
    %295 = arith.mulf %293, %294 : vector<16x1xf32>
    %296 = arith.mulf %295, %12 : vector<16x1xf32>
    %297 = vector.shape_cast %296 : vector<16x1xf32> to vector<1x16x1xf32>
    %cst_89 = arith.constant dense<0.000000e+00> : vector<1xf32>
    %298 = vector.multi_reduction <add>, %297, %cst_89 [1, 2] : vector<1x16x1xf32> to vector<1xf32>
    %299 = vector.shape_cast %298 : vector<1xf32> to vector<1x1x1xf32>
    %300 = vector.extract %299[0, 0, 0] : f32 from vector<1x1x1xf32>
    %301 = vector.shape_cast %12 : vector<16x1xf32> to vector<1x16x1xf32>
    %cst_90 = arith.constant dense<0.000000e+00> : vector<1xf32>
    %302 = vector.multi_reduction <add>, %301, %cst_90 [1, 2] : vector<1x16x1xf32> to vector<1xf32>
    %303 = vector.shape_cast %302 : vector<1xf32> to vector<1x1x1xf32>
    %304 = vector.extract %303[0, 0, 0] : f32 from vector<1x1x1xf32>
    %cst_91 = arith.constant 1.000000e-03 : f32
    %305 = arith.addf %304, %cst_91 : f32
    %306 = arith.divf %300, %305 : f32
    %cst_92 = arith.constant 5.000000e-01 : f32
    %307 = arith.mulf %cst_92, %306 : f32
    %308 = arith.addf %252, %307 : f32
    %c0_93 = arith.constant 0 : index
    %c0_94 = arith.constant 0 : index
    %309 = memref.load %arg5[%c0_93, %c0_94] : memref<1x1xf32, #tpu.memory_space<smem>>
    memref.store %308, %arg5[%c0_93, %c0_94] : memref<1x1xf32, #tpu.memory_space<smem>>
    return
  }
}

</mosaic_0001>

<llo_original>
// kernel: create_model_disti_forward.1
$region0: #{create_model_disti_forward.1}
  #allocation0 [shape = 'u32[]', space=smem, size = 0x4, offset = 0x4, fixed_abs, tag = 'smem constant byte address 0x4 - core index']
  #allocation1 [shape = 'u32[144,128]{1,0:T(1,128)}', space=vmem, size = 0x12000, scoped, tag = 'internal scratch']
  %s0 = inlined_call_operand.vmem [shape: f32[2,16,37], index: 0, kind: input, shape index: {}]
  %s1 = inlined_call_operand.vmem [shape: f32[2,37,42], index: 1, kind: input, shape index: {}]
  %s2 = inlined_call_operand.vmem [shape: f32[2,37,5], index: 2, kind: input, shape index: {}]
  %s3 = inlined_call_operand.vmem [shape: f32[2,1,128], index: 3, kind: input, shape index: {}]
  %s4 = inlined_call_operand.vmem [shape: s32[16,4], index: 4, kind: input, shape index: {}]
  %s5 = inlined_call_operand.hbm [shape: f32[1,1], index: 5, kind: output, shape index: {0}]
  %s6 = inlined_call_operand.vmem [shape: f32[16,10], index: 6, kind: output, shape index: {1}]
  %7 = xla_tuple %s5, %s6
  %s8 = sld [smem:[#allocation0]]
  $region38: #{create_model_disti_forward.1} parent=0
    _
  %s10 = ssub.s32 1, %s8
  %s11 = scalar_select 0, %s10, %s8
  $region1: #{create_model_disti_forward.1} parent=0
    #allocation2 [shape = 'u8[512]{0}', space=smem, size = 0x200, scoped, tag = 'output window, operand 0, single buffered']
    #allocation3 [shape = 's32[1]{0}', space=sflag, size = 0x4, scoped, tag = 'scoped memory for create_model_disti_forward.1']
    %12 = vsyncpa [#allocation3], 0
    // Predicated region
    $region2: #{create_model_disti_forward.1} parent=1 // pred_check
      _
    $region3: #{create_model_disti_forward.1} parent=1 // pred_check_branch
      %14 = sbr.rel (0) target = $region5
    $region4: #{create_model_disti_forward.1} parent=1 // pred_region
      _
    $region5: #{create_model_disti_forward.1} parent=1 // pred_fallthru
      _
    // Predicated region
    $region6: #{create_model_disti_forward.1} parent=1 // pred_check
      _
    $region7: #{create_model_disti_forward.1} parent=1 // pred_check_branch
      %16 = sbr.rel (0) target = $region9
    $region8: #{create_model_disti_forward.1} parent=1 // pred_region
      _
    $region9: #{create_model_disti_forward.1} parent=1 // pred_fallthru
      _
    // Predicated region
    $region10: #{create_model_disti_forward.1} parent=1 // pred_check
      _
    $region11: #{create_model_disti_forward.1} parent=1 // pred_check_branch
      %18 = sbr.rel (0) target = $region13
    $region12: #{create_model_disti_forward.1} parent=1 // pred_region
      _
    $region13: #{create_model_disti_forward.1} parent=1 // pred_fallthru
      _
    // Predicated region
    $region14: #{create_model_disti_forward.1} parent=1 // pred_check
      _
    $region15: #{create_model_disti_forward.1} parent=1 // pred_check_branch
      %20 = sbr.rel (0) target = $region17
    $region16: #{create_model_disti_forward.1} parent=1 // pred_region
      _
    $region17: #{create_model_disti_forward.1} parent=1 // pred_fallthru
      _
    // Predicated region
    $region18: #{create_model_disti_forward.1} parent=1 // pred_check
      _
    $region19: #{create_model_disti_forward.1} parent=1 // pred_check_branch
      %22 = sbr.rel (0) target = $region21
    $region20: #{create_model_disti_forward.1} parent=1 // pred_region
      _
    $region21: #{create_model_disti_forward.1} parent=1 // pred_fallthru
      _
    %v23 = vld [vmem:[%s4] sm:$0xff]
    %v24 = vld [vmem:[%s4 + $0x8] sm:$0xff]
    %vm25 = vcmp.eq.s32.totalorder %v23, 1
    %vm26 = vcmp.eq.s32.totalorder %v24, 1
    %v27 = vsel %vm25, 1, 0
    %v28 = vsel %vm26, 1, 0
    %v29 = vcvt.s32.f32 %v27
    %v30 = vcvt.s32.f32 %v28
    %vm31 = vcmp.ne.s32.totalorder %v23, 4294967295
    %vm32 = vcmp.ne.s32.totalorder %v24, 4294967295
    %v33 = vsel %vm31, 1, 0
    %v34 = vsel %vm32, 1, 0
    %v35 = vcvt.s32.f32 %v33
    %v36 = vcvt.s32.f32 %v34
    %v37 = vlaneseq
    %v38 = vand.u32 %v37, 127
    %vm39 = vcmp.ge.s32.totalorder %v38, 32
    %v40 = vsub.s32 %v38, 32
    %41 = vset.pattern.permute.xlu0 0
    %42 = vperm.xlu0 %41, %v23
    %v43 = vpop.permute.xlu0 %42
    %44 = vset.pattern.permute.xlu0 0
    %45 = vperm.xlu0 %44, %v24
    %v46 = vpop.permute.xlu0 %45
    %vm47 = vcmp.eq.s32.totalorder %v40, %v43
    %vm48 = vcmp.eq.s32.totalorder %v40, %v46
    %vm49 = vmand %vm39, %vm47
    %vm50 = vmand %vm39, %vm48
    %v51 = vsel %vm49, 1, 0
    %v52 = vsel %vm50, 1, 0
    %v53 = vcvt.s32.f32 %v51
    %v54 = vcvt.s32.f32 %v52
    %vm55 = vcmp.gt.s32.totalorder %v23, 0
    %v56 = vsel %vm55, %v23, 0
    %vm57 = vcmp.gt.s32.totalorder %v24, 0
    %v58 = vsel %vm57, %v24, 0
    %59 = vset.pattern.permute.xlu0 0
    %60 = vperm.xlu0 %59, %v56
    %v61 = vpop.permute.xlu0 %60
    %62 = vset.pattern.permute.xlu0 0
    %63 = vperm.xlu0 %62, %v58
    %v64 = vpop.permute.xlu0 %63
    %vm65 = vcmp.eq.s32.totalorder %v38, %v61
    %vm66 = vcmp.eq.s32.totalorder %v38, %v64
    %v67 = vsel %vm65, 1, 0
    %v68 = vsel %vm66, 1, 0
    %v69 = vcvt.s32.f32 %v67
    %v70 = vcvt.s32.f32 %v68
    %71 = vset.pattern.permute.xlu0 1
    %72 = vperm.xlu0 %71, %v56
    %v73 = vpop.permute.xlu0 %72
    %74 = vset.pattern.permute.xlu0 1
    %75 = vperm.xlu0 %74, %v58
    %v76 = vpop.permute.xlu0 %75
    %vm77 = vcmp.eq.s32.totalorder %v38, %v73
    %vm78 = vcmp.eq.s32.totalorder %v38, %v76
    %v79 = vsel %vm77, 1, 0
    %v80 = vsel %vm78, 1, 0
    %v81 = vcvt.s32.f32 %v79
    %v82 = vcvt.s32.f32 %v80
    %85 = vrot.lane.b32.xlu0 %v35, 2
    %v86 = vpop.permute.xlu0 %85
    %87 = vrot.lane.b32.xlu0 %v36, 2
    %v88 = vpop.permute.xlu0 %87
    %v91 = vmul.f32 %v29, %v86
    %v92 = vmul.f32 %v30, %v88
    %93 = vrot.lane.b32.xlu0 %v35, 1
    %v94 = vpop.permute.xlu0 %93
    %95 = vrot.lane.b32.xlu0 %v36, 1
    %v96 = vpop.permute.xlu0 %95
    %v99 = vmul.f32 %v29, %v94
    %v100 = vmul.f32 %v30, %v96
    %103 = vrot.lane.b32.xlu0 %v91, 126
    %v104 = vpop.permute.xlu0 %103
    %105 = vrot.lane.b32.xlu0 %v92, 126
    %v106 = vpop.permute.xlu0 %105
    %vm109 = vcmask 7168
    %v110 = vsel %vm109, %v104, 0.0
    %v111 = vsel %vm109, %v106, 0.0
    %v112 = vadd.f32 %v110, %v111
    %113 = vadd.xlane.f32.xlu0 %v112
    %v114 = vpop.xlane.xlu0 %113
    %v115 = vrot.slane %v114, 4
    %v116 = vadd.f32 %v114, %v115
    %v117 = vrot.slane %v116, 2
    %v118 = vadd.f32 %v116, %v117
    %v119 = vrot.slane %v118, 1
    %v120 = vadd.f32 %v118, %v119
    %s121 = vtos %v120
    %s122 = smax.f32 %s121, 1.0
    %v123 = vstv %s122
    %v124 = vrcp.pop %v123
    %s125 = vtos %v124
    %128 = vrot.lane.b32.xlu0 %v99, 126
    %v129 = vpop.permute.xlu0 %128
    %130 = vrot.lane.b32.xlu0 %v100, 126
    %v131 = vpop.permute.xlu0 %130
    %v134 = vsel %vm109, %v129, 0.0
    %v135 = vsel %vm109, %v131, 0.0
    %v136 = vadd.f32 %v134, %v135
    %137 = vadd.xlane.f32.xlu0 %v136
    %v138 = vpop.xlane.xlu0 %137
    %v139 = vrot.slane %v138, 4
    %v140 = vadd.f32 %v138, %v139
    %v141 = vrot.slane %v140, 2
    %v142 = vadd.f32 %v140, %v141
    %v143 = vrot.slane %v142, 1
    %v144 = vadd.f32 %v142, %v143
    %s145 = vtos %v144
    %s146 = smax.f32 %s145, 1.0
    %v147 = vstv %s146
    %v148 = vrcp.pop %v147
    %s149 = vtos %v148
    %v150 = vld [vmem:[%s3] sm:$0x1]
    %v151 = vld [vmem:[%s0] sm:$0xff]
    %v152 = vld [vmem:[%s0 + $0x8] sm:$0xff]
    %v153 = vadd.f32 %v151, %v53
    %v154 = vadd.f32 %v152, %v54
    %v155 = vld [vmem:[%s1] sm:$0xff]
    %v156 = vld [vmem:[%s1 + $0x8] sm:$0xff]
    %v157 = vld [vmem:[%s1 + $0x10] sm:$0xff]
    %v158 = vld [vmem:[%s1 + $0x18] sm:$0xff]
    %v159 = vld [vmem:[%s1 + $0x20] sm:$0x1f]
    %vm160 = vcmask 302080
    %v162 = vsel %vm160, %v153, 0
    %v165 = vsel %vm160, %v154, 0
    %vm167 = vcmask 1044480
    %v169 = vsel %vm167, %v159, 0
    %171 = vmatprep.subr.mxu0 0.0
    %172 = vmatpush1.msra.mxu0 0.0
    %173 = vmatprep.subr.mxu0 0.0
    %174 = vmatpush1.msra.mxu0 0.0
    %175 = vmatprep.subr.mxu0 0.0
    %176 = vmatpush1.msra.mxu0 0.0
    %177 = vmatprep.subr.mxu0 0.0
    %178 = vmatpush1.msra.mxu0 0.0
    %179 = vmatprep.subr.mxu0 0.0
    %180 = vmatpush1.msra.mxu0 0.0
    %181 = vmatprep.subr.mxu0 0.0
    %182 = vmatpush1.msra.mxu0 0.0
    %183 = vmatprep.subr.mxu0 0.0
    %184 = vmatpush1.msra.mxu0 0.0
    %185 = vmatprep.subr.mxu0 0.0
    %186 = vmatpush1.msra.mxu0 0.0
    %187 = vmatprep.subr.mxu0 0.0
    %188 = vmatpush1.msra.mxu0 0.0
    %189 = vmatprep.subr.mxu0 0.0
    %190 = vmatpush1.msra.mxu0 0.0
    %191 = vmatprep.subr.mxu0 0.0
    %192 = vmatpush1.msra.mxu0 0.0
    %193 = vmatprep.subr.mxu0 0.0
    %194 = vmatpush1.msra.mxu0 %v169
    %195 = vmatprep.subr.mxu0 0.0
    %196 = vmatpush1.msra.mxu0 %v158
    %197 = vmatprep.subr.mxu0 0.0
    %198 = vmatpush1.msra.mxu0 %v157
    %199 = vmatprep.subr.mxu0 0.0
    %200 = vmatpush1.msra.mxu0 %v156
    %201 = vmatprep.subr.mxu0 0.0
    %202 = vmatpush1.msra.mxu0 %v155
    %203 = vmatprep.subr.mxu0 0.0
    %204 = vmatpush2.msra.mxu0 0.0
    %205 = vmatprep.subr.mxu0 0.0
    %206 = vmatpush2.msra.mxu0 0.0
    %207 = vmatprep.subr.mxu0 0.0
    %208 = vmatpush2.msra.mxu0 0.0
    %209 = vmatprep.subr.mxu0 0.0
    %210 = vmatpush2.msra.mxu0 0.0
    %211 = vmatprep.subr.mxu0 0.0
    %212 = vmatpush2.msra.mxu0 0.0
    %213 = vmatprep.subr.mxu0 0.0
    %214 = vmatpush2.msra.mxu0 0.0
    %215 = vmatprep.subr.mxu0 0.0
    %216 = vmatpush2.msra.mxu0 0.0
    %217 = vmatprep.subr.mxu0 0.0
    %218 = vmatpush2.msra.mxu0 0.0
    %219 = vmatprep.subr.mxu0 0.0
    %220 = vmatpush2.msra.mxu0 0.0
    %221 = vmatprep.subr.mxu0 0.0
    %222 = vmatpush2.msra.mxu0 0.0
    %223 = vmatprep.subr.mxu0 0.0
    %224 = vmatpush2.msra.mxu0 0.0
    %225 = vmatprep.subr.mxu0 0.0
    %226 = vmatpush2.msra.mxu0 0.0
    %227 = vmatprep.subr.mxu0 0.0
    %228 = vmatpush2.msra.mxu0 0.0
    %229 = vmatprep.subr.mxu0 0.0
    %230 = vmatpush2.msra.mxu0 0.0
    %231 = vmatprep.subr.mxu0 0.0
    %232 = vmatpush2.msra.mxu0 0.0
    %233 = vmatprep.subr.mxu0 0.0
    %234 = vmatpush2.msra.mxu0 0.0
    %235 = vmatprep.mubr.f32.mxu0 0.0
    %236 = vmatmul.mubr.f32.gmra.mxu0 %v162
    %v237 = vpop.f32.mrf.mxu0
    %v238 = vadd.f32 0.0, %v237
    %v239 = vpop.f32.mrf.mxu0
    %240 = vmatprep.mubr.f32.mxu0 0.0
    %241 = vmatmul.mubr.f32.gmra.mxu0 %v165
    %v242 = vpop.f32.mrf.mxu0
    %v243 = vadd.f32 0.0, %v242
    %v244 = vpop.f32.mrf.mxu0
    %245 = vdwg.mxu0
    %v247 = vlaneseq
    %v248 = vshrl.u32 %v247, 7
    %v249 = vsub.s32 0, %v248
    %v250 = vrot.slane %v150, %v249
    %v252 = vadd.f32 %v238, %v250
    %v253 = vadd.f32 %v243, %v250
    %v254 = vtanh.pop %v252
    %v255 = vtanh.pop %v253
    %258 = vrot.lane.b32.xlu0 %v254, 123
    %v259 = vpop.permute.xlu0 %258
    %260 = vrot.lane.b32.xlu0 %v255, 123
    %v261 = vpop.permute.xlu0 %260
    %v264 = vsel %vm160, %v259, 0.0
    %265 = vadd.xlane.f32.xlu0 %v264
    %v266 = vpop.xlane.xlu0 %265
    %v267 = vsel %vm160, %v261, 0.0
    %268 = vadd.xlane.f32.xlu0 %v267
    %v269 = vpop.xlane.xlu0 %268
    %v270 = vrcp.pop 37.0
    %v271 = vmul.f32 %v266, %v270
    %v272 = vmul.f32 %v269, %v270
    %v273 = vsub.f32 %v254, %v271
    %v274 = vsub.f32 %v255, %v272
    %v275 = vmul.f32 %v273, %v273
    %v276 = vmul.f32 %v274, %v274
    %279 = vrot.lane.b32.xlu0 %v275, 123
    %v280 = vpop.permute.xlu0 %279
    %281 = vrot.lane.b32.xlu0 %v276, 123
    %v282 = vpop.permute.xlu0 %281
    %v285 = vsel %vm160, %v280, 0.0
    %286 = vadd.xlane.f32.xlu0 %v285
    %v287 = vpop.xlane.xlu0 %286
    %v288 = vsel %vm160, %v282, 0.0
    %289 = vadd.xlane.f32.xlu0 %v288
    %v290 = vpop.xlane.xlu0 %289
    %v291 = vmul.f32 %v287, %v270
    %v292 = vmul.f32 %v290, %v270
    %v293 = vadd.f32 %v291, 1e-05
    %v294 = vadd.f32 %v292, 1e-05
    %v295 = vrsqrt.pop %v293
    %v296 = vrsqrt.pop %v294
    %v297 = vmul.f32 %v273, %v295
    %v298 = vmul.f32 %v274, %v296
    %299 = vrot.lane.b32.xlu0 %v250, 91
    %v300 = vpop.permute.xlu0 %299
    %v302 = vmul.f32 %v297, %v300
    %v303 = vmul.f32 %v298, %v300
    %304 = vrot.lane.b32.xlu0 %v250, 54
    %v305 = vpop.permute.xlu0 %304
    %v307 = vadd.f32 %v302, %v305
    %v308 = vadd.f32 %v303, %v305
    %v309 = vld [vmem:[%s2] sm:$0xff]
    %v310 = vld [vmem:[%s2 + $0x8] sm:$0xff]
    %v311 = vld [vmem:[%s2 + $0x10] sm:$0xff]
    %v312 = vld [vmem:[%s2 + $0x18] sm:$0xff]
    %v313 = vld [vmem:[%s2 + $0x20] sm:$0x1f]
    %316 = vrot.lane.b32.xlu0 %v307, 123
    %v317 = vpop.permute.xlu0 %316
    %318 = vrot.lane.b32.xlu0 %v308, 123
    %v319 = vpop.permute.xlu0 %318
    %320 = vrot.lane.b32.xlu0 %v250, 12
    %v321 = vpop.permute.xlu0 %320
    %v323 = vsel %vm160, %v317, 0
    %v325 = vsel %vm160, %v319, 0
    %v328 = vsel %vm167, %v313, 0
    %330 = vmatprep.subr.mxu0 0.0
    %331 = vmatpush1.msra.mxu0 0.0
    %332 = vmatprep.subr.mxu0 0.0
    %333 = vmatpush1.msra.mxu0 0.0
    %334 = vmatprep.subr.mxu0 0.0
    %335 = vmatpush1.msra.mxu0 0.0
    %336 = vmatprep.subr.mxu0 0.0
    %337 = vmatpush1.msra.mxu0 0.0
    %338 = vmatprep.subr.mxu0 0.0
    %339 = vmatpush1.msra.mxu0 0.0
    %340 = vmatprep.subr.mxu0 0.0
    %341 = vmatpush1.msra.mxu0 0.0
    %342 = vmatprep.subr.mxu0 0.0
    %343 = vmatpush1.msra.mxu0 0.0
    %344 = vmatprep.subr.mxu0 0.0
    %345 = vmatpush1.msra.mxu0 0.0
    %346 = vmatprep.subr.mxu0 0.0
    %347 = vmatpush1.msra.mxu0 0.0
    %348 = vmatprep.subr.mxu0 0.0
    %349 = vmatpush1.msra.mxu0 0.0
    %350 = vmatprep.subr.mxu0 0.0
    %351 = vmatpush1.msra.mxu0 0.0
    %352 = vmatprep.subr.mxu0 0.0
    %353 = vmatpush1.msra.mxu0 %v328
    %354 = vmatprep.subr.mxu0 0.0
    %355 = vmatpush1.msra.mxu0 %v312
    %356 = vmatprep.subr.mxu0 0.0
    %357 = vmatpush1.msra.mxu0 %v311
    %358 = vmatprep.subr.mxu0 0.0
    %359 = vmatpush1.msra.mxu0 %v310
    %360 = vmatprep.subr.mxu0 0.0
    %361 = vmatpush1.msra.mxu0 %v309
    %362 = vmatprep.subr.mxu0 0.0
    %363 = vmatpush2.msra.mxu0 0.0
    %364 = vmatprep.subr.mxu0 0.0
    %365 = vmatpush2.msra.mxu0 0.0
    %366 = vmatprep.subr.mxu0 0.0
    %367 = vmatpush2.msra.mxu0 0.0
    %368 = vmatprep.subr.mxu0 0.0
    %369 = vmatpush2.msra.mxu0 0.0
    %370 = vmatprep.subr.mxu0 0.0
    %371 = vmatpush2.msra.mxu0 0.0
    %372 = vmatprep.subr.mxu0 0.0
    %373 = vmatpush2.msra.mxu0 0.0
    %374 = vmatprep.subr.mxu0 0.0
    %375 = vmatpush2.msra.mxu0 0.0
    %376 = vmatprep.subr.mxu0 0.0
    %377 = vmatpush2.msra.mxu0 0.0
    %378 = vmatprep.subr.mxu0 0.0
    %379 = vmatpush2.msra.mxu0 0.0
    %380 = vmatprep.subr.mxu0 0.0
    %381 = vmatpush2.msra.mxu0 0.0
    %382 = vmatprep.subr.mxu0 0.0
    %383 = vmatpush2.msra.mxu0 0.0
    %384 = vmatprep.subr.mxu0 0.0
    %385 = vmatpush2.msra.mxu0 0.0
    %386 = vmatprep.subr.mxu0 0.0
    %387 = vmatpush2.msra.mxu0 0.0
    %388 = vmatprep.subr.mxu0 0.0
    %389 = vmatpush2.msra.mxu0 0.0
    %390 = vmatprep.subr.mxu0 0.0
    %391 = vmatpush2.msra.mxu0 0.0
    %392 = vmatprep.subr.mxu0 0.0
    %393 = vmatpush2.msra.mxu0 0.0
    %394 = vmatprep.mubr.f32.mxu0 0.0
    %395 = vmatmul.mubr.f32.gmra.mxu0 %v323
    %v396 = vpop.f32.mrf.mxu0
    %v397 = vadd.f32 %v321, %v396
    %v398 = vpop.f32.mrf.mxu0
    %399 = vmatprep.mubr.f32.mxu0 0.0
    %400 = vmatmul.mubr.f32.gmra.mxu0 %v325
    %v401 = vpop.f32.mrf.mxu0
    %v402 = vadd.f32 %v321, %v401
    %v403 = vpop.f32.mrf.mxu0
    %404 = vdwg.mxu0
    %v405 = vadd.f32 %v252, 0.0
    %v406 = vadd.f32 %v253, 0.0
    %v407 = vadd.f32 %v397, 0.0
    %v408 = vadd.f32 %v402, 0.0
    %vm409 = vcmask 39936
    %v410 = vsel %vm409, %v252, -inf
    %411 = vmax.xlane.f32.xlu0 %v410
    %v412 = vpop.xlane.xlu0 %411
    %v413 = vsel %vm409, %v253, -inf
    %414 = vmax.xlane.f32.xlu0 %v413
    %v415 = vpop.xlane.xlu0 %414
    %v416 = vsub.f32 %v252, %v412
    %v417 = vsub.f32 %v253, %v415
    %v418 = vmul.f32 %v416, 1.442695
    %v419 = vpow.pop %v418
    %v420 = vmul.f32 %v417, 1.442695
    %v421 = vpow.pop %v420
    %v422 = vsel %vm409, %v419, 0.0
    %423 = vadd.xlane.f32.xlu0 %v422
    %v424 = vpop.xlane.xlu0 %423
    %v425 = vsel %vm409, %v421, 0.0
    %426 = vadd.xlane.f32.xlu0 %v425
    %v427 = vpop.xlane.xlu0 %426
    %v428 = vlog2.pop %v424
    %v429 = vmul.f32 %v428, 0.6931472
    %v430 = vlog2.pop %v427
    %v431 = vmul.f32 %v430, 0.6931472
    %v432 = vsub.f32 %v416, %v429
    %v433 = vsub.f32 %v417, %v431
    %v434 = vsel %vm409, %v397, -inf
    %435 = vmax.xlane.f32.xlu0 %v434
    %v436 = vpop.xlane.xlu0 %435
    %v437 = vsel %vm409, %v402, -inf
    %438 = vmax.xlane.f32.xlu0 %v437
    %v439 = vpop.xlane.xlu0 %438
    %v440 = vsub.f32 %v397, %v436
    %v441 = vsub.f32 %v402, %v439
    %v442 = vmul.f32 %v440, 1.442695
    %v443 = vpow.pop %v442
    %v444 = vmul.f32 %v441, 1.442695
    %v445 = vpow.pop %v444
    %v446 = vsel %vm409, %v443, 0.0
    %447 = vadd.xlane.f32.xlu0 %v446
    %v448 = vpop.xlane.xlu0 %447
    %v449 = vsel %vm409, %v445, 0.0
    %450 = vadd.xlane.f32.xlu0 %v449
    %v451 = vpop.xlane.xlu0 %450
    %v452 = vlog2.pop %v448
    %v453 = vmul.f32 %v452, 0.6931472
    %v454 = vlog2.pop %v451
    %v455 = vmul.f32 %v454, 0.6931472
    %v456 = vsub.f32 %v440, %v453
    %v457 = vsub.f32 %v441, %v455
    %v458 = vmul.f32 %v432, %v69
    %v459 = vmul.f32 %v433, %v70
    %v460 = vsel %vm409, %v458, 0.0
    %461 = vadd.xlane.f32.xlu0 %v460
    %v462 = vpop.xlane.xlu0 %461
    %v463 = vsel %vm409, %v459, 0.0
    %464 = vadd.xlane.f32.xlu0 %v463
    %v465 = vpop.xlane.xlu0 %464
    %v466 = vsub.f32 0.0, %v462
    %v467 = vsub.f32 0.0, %v465
    %v468 = vmul.f32 %v466, %v91
    %v469 = vmul.f32 %v467, %v92
    %472 = vrot.lane.b32.xlu0 %v468, 126
    %v473 = vpop.permute.xlu0 %472
    %474 = vrot.lane.b32.xlu0 %v469, 126
    %v475 = vpop.permute.xlu0 %474
    %v478 = vsel %vm109, %v473, 0.0
    %v479 = vsel %vm109, %v475, 0.0
    %v480 = vadd.f32 %v478, %v479
    %481 = vadd.xlane.f32.xlu0 %v480
    %v482 = vpop.xlane.xlu0 %481
    %v483 = vrot.slane %v482, 4
    %v484 = vadd.f32 %v482, %v483
    %v485 = vrot.slane %v484, 2
    %v486 = vadd.f32 %v484, %v485
    %v487 = vrot.slane %v486, 1
    %v488 = vadd.f32 %v486, %v487
    %s489 = vtos %v488
    %s490 = smul.f32 %s489, %s125
    %v491 = vmul.f32 %v456, %v81
    %v492 = vmul.f32 %v457, %v82
    %v493 = vsel %vm409, %v491, 0.0
    %494 = vadd.xlane.f32.xlu0 %v493
    %v495 = vpop.xlane.xlu0 %494
    %v496 = vsel %vm409, %v492, 0.0
    %497 = vadd.xlane.f32.xlu0 %v496
    %v498 = vpop.xlane.xlu0 %497
    %v499 = vsub.f32 0.0, %v495
    %v500 = vsub.f32 0.0, %v498
    %v501 = vmul.f32 %v499, %v99
    %v502 = vmul.f32 %v500, %v100
    %505 = vrot.lane.b32.xlu0 %v501, 126
    %v506 = vpop.permute.xlu0 %505
    %507 = vrot.lane.b32.xlu0 %v502, 126
    %v508 = vpop.permute.xlu0 %507
    %v511 = vsel %vm109, %v506, 0.0
    %v512 = vsel %vm109, %v508, 0.0
    %v513 = vadd.f32 %v511, %v512
    %514 = vadd.xlane.f32.xlu0 %v513
    %v515 = vpop.xlane.xlu0 %514
    %v516 = vrot.slane %v515, 4
    %v517 = vadd.f32 %v515, %v516
    %v518 = vrot.slane %v517, 2
    %v519 = vadd.f32 %v517, %v518
    %v520 = vrot.slane %v519, 1
    %v521 = vadd.f32 %v519, %v520
    %s522 = vtos %v521
    %s523 = smul.f32 %s522, %s149
    %s524 = sadd.f32 %s490, %s523
    %s525 = smul.f32 %s524, 0.5
    %s526 = sadd.f32 %s525, 0.0
    %v527 = vmul.f32 %v432, 1.442695
    %v528 = vpow.pop %v527
    %v529 = vmul.f32 %v433, 1.442695
    %v530 = vpow.pop %v529
    %v531 = vmul.f32 %v456, 1.442695
    %v532 = vpow.pop %v531
    %v533 = vmul.f32 %v457, 1.442695
    %v534 = vpow.pop %v533
    %s535 = scalar_lea.vmem %s3, 1
    %v536 = vld [vmem:[%s535] sm:$0x1]
    %s537 = scalar_lea.vmem %s0, 16
    %v538 = vld [vmem:[%s537] sm:$0xff]
    %v539 = vld [vmem:[%s537 + $0x8] sm:$0xff]
    %v540 = vadd.f32 %v538, %v53
    %v541 = vadd.f32 %v539, %v54
    %s542 = scalar_lea.vmem %s1, 40
    %v543 = vld [vmem:[%s542] sm:$0xff]
    %v544 = vld [vmem:[%s542 + $0x8] sm:$0xff]
    %v545 = vld [vmem:[%s542 + $0x10] sm:$0xff]
    %v546 = vld [vmem:[%s542 + $0x18] sm:$0xff]
    %v547 = vld [vmem:[%s542 + $0x20] sm:$0x1f]
    %v549 = vsel %vm160, %v540, 0
    %v552 = vsel %vm160, %v541, 0
    %v555 = vsel %vm167, %v547, 0
    %557 = vmatprep.subr.mxu0 0.0
    %558 = vmatpush1.msra.mxu0 0.0
    %559 = vmatprep.subr.mxu0 0.0
    %560 = vmatpush1.msra.mxu0 0.0
    %561 = vmatprep.subr.mxu0 0.0
    %562 = vmatpush1.msra.mxu0 0.0
    %563 = vmatprep.subr.mxu0 0.0
    %564 = vmatpush1.msra.mxu0 0.0
    %565 = vmatprep.subr.mxu0 0.0
    %566 = vmatpush1.msra.mxu0 0.0
    %567 = vmatprep.subr.mxu0 0.0
    %568 = vmatpush1.msra.mxu0 0.0
    %569 = vmatprep.subr.mxu0 0.0
    %570 = vmatpush1.msra.mxu0 0.0
    %571 = vmatprep.subr.mxu0 0.0
    %572 = vmatpush1.msra.mxu0 0.0
    %573 = vmatprep.subr.mxu0 0.0
    %574 = vmatpush1.msra.mxu0 0.0
    %575 = vmatprep.subr.mxu0 0.0
    %576 = vmatpush1.msra.mxu0 0.0
    %577 = vmatprep.subr.mxu0 0.0
    %578 = vmatpush1.msra.mxu0 0.0
    %579 = vmatprep.subr.mxu0 0.0
    %580 = vmatpush1.msra.mxu0 %v555
    %581 = vmatprep.subr.mxu0 0.0
    %582 = vmatpush1.msra.mxu0 %v546
    %583 = vmatprep.subr.mxu0 0.0
    %584 = vmatpush1.msra.mxu0 %v545
    %585 = vmatprep.subr.mxu0 0.0
    %586 = vmatpush1.msra.mxu0 %v544
    %587 = vmatprep.subr.mxu0 0.0
    %588 = vmatpush1.msra.mxu0 %v543
    %589 = vmatprep.subr.mxu0 0.0
    %590 = vmatpush2.msra.mxu0 0.0
    %591 = vmatprep.subr.mxu0 0.0
    %592 = vmatpush2.msra.mxu0 0.0
    %593 = vmatprep.subr.mxu0 0.0
    %594 = vmatpush2.msra.mxu0 0.0
    %595 = vmatprep.subr.mxu0 0.0
    %596 = vmatpush2.msra.mxu0 0.0
    %597 = vmatprep.subr.mxu0 0.0
    %598 = vmatpush2.msra.mxu0 0.0
    %599 = vmatprep.subr.mxu0 0.0
    %600 = vmatpush2.msra.mxu0 0.0
    %601 = vmatprep.subr.mxu0 0.0
    %602 = vmatpush2.msra.mxu0 0.0
    %603 = vmatprep.subr.mxu0 0.0
    %604 = vmatpush2.msra.mxu0 0.0
    %605 = vmatprep.subr.mxu0 0.0
    %606 = vmatpush2.msra.mxu0 0.0
    %607 = vmatprep.subr.mxu0 0.0
    %608 = vmatpush2.msra.mxu0 0.0
    %609 = vmatprep.subr.mxu0 0.0
    %610 = vmatpush2.msra.mxu0 0.0
    %611 = vmatprep.subr.mxu0 0.0
    %612 = vmatpush2.msra.mxu0 0.0
    %613 = vmatprep.subr.mxu0 0.0
    %614 = vmatpush2.msra.mxu0 0.0
    %615 = vmatprep.subr.mxu0 0.0
    %616 = vmatpush2.msra.mxu0 0.0
    %617 = vmatprep.subr.mxu0 0.0
    %618 = vmatpush2.msra.mxu0 0.0
    %619 = vmatprep.subr.mxu0 0.0
    %620 = vmatpush2.msra.mxu0 0.0
    %621 = vmatprep.mubr.f32.mxu0 0.0
    %622 = vmatmul.mubr.f32.gmra.mxu0 %v549
    %v623 = vpop.f32.mrf.mxu0
    %v624 = vadd.f32 0.0, %v623
    %v625 = vpop.f32.mrf.mxu0
    %626 = vmatprep.mubr.f32.mxu0 0.0
    %627 = vmatmul.mubr.f32.gmra.mxu0 %v552
    %v628 = vpop.f32.mrf.mxu0
    %v629 = vadd.f32 0.0, %v628
    %v630 = vpop.f32.mrf.mxu0
    %631 = vdwg.mxu0
    %v633 = vlaneseq
    %v634 = vshrl.u32 %v633, 7
    %v635 = vsub.s32 0, %v634
    %v636 = vrot.slane %v536, %v635
    %v638 = vadd.f32 %v624, %v636
    %v639 = vadd.f32 %v629, %v636
    %v640 = vtanh.pop %v638
    %v641 = vtanh.pop %v639
    %644 = vrot.lane.b32.xlu0 %v640, 123
    %v645 = vpop.permute.xlu0 %644
    %646 = vrot.lane.b32.xlu0 %v641, 123
    %v647 = vpop.permute.xlu0 %646
    %v650 = vsel %vm160, %v645, 0.0
    %651 = vadd.xlane.f32.xlu0 %v650
    %v652 = vpop.xlane.xlu0 %651
    %v653 = vsel %vm160, %v647, 0.0
    %654 = vadd.xlane.f32.xlu0 %v653
    %v655 = vpop.xlane.xlu0 %654
    %v656 = vmul.f32 %v652, %v270
    %v657 = vmul.f32 %v655, %v270
    %v658 = vsub.f32 %v640, %v656
    %v659 = vsub.f32 %v641, %v657
    %v660 = vmul.f32 %v658, %v658
    %v661 = vmul.f32 %v659, %v659
    %664 = vrot.lane.b32.xlu0 %v660, 123
    %v665 = vpop.permute.xlu0 %664
    %666 = vrot.lane.b32.xlu0 %v661, 123
    %v667 = vpop.permute.xlu0 %666
    %v670 = vsel %vm160, %v665, 0.0
    %671 = vadd.xlane.f32.xlu0 %v670
    %v672 = vpop.xlane.xlu0 %671
    %v673 = vsel %vm160, %v667, 0.0
    %674 = vadd.xlane.f32.xlu0 %v673
    %v675 = vpop.xlane.xlu0 %674
    %v676 = vmul.f32 %v672, %v270
    %v677 = vmul.f32 %v675, %v270
    %v678 = vadd.f32 %v676, 1e-05
    %v679 = vadd.f32 %v677, 1e-05
    %v680 = vrsqrt.pop %v678
    %v681 = vrsqrt.pop %v679
    %v682 = vmul.f32 %v658, %v680
    %v683 = vmul.f32 %v659, %v681
    %684 = vrot.lane.b32.xlu0 %v636, 91
    %v685 = vpop.permute.xlu0 %684
    %v687 = vmul.f32 %v682, %v685
    %v688 = vmul.f32 %v683, %v685
    %689 = vrot.lane.b32.xlu0 %v636, 54
    %v690 = vpop.permute.xlu0 %689
    %v692 = vadd.f32 %v687, %v690
    %v693 = vadd.f32 %v688, %v690
    %s694 = scalar_lea.vmem %s2, 40
    %v695 = vld [vmem:[%s694] sm:$0xff]
    %v696 = vld [vmem:[%s694 + $0x8] sm:$0xff]
    %v697 = vld [vmem:[%s694 + $0x10] sm:$0xff]
    %v698 = vld [vmem:[%s694 + $0x18] sm:$0xff]
    %v699 = vld [vmem:[%s694 + $0x20] sm:$0x1f]
    %702 = vrot.lane.b32.xlu0 %v692, 123
    %v703 = vpop.permute.xlu0 %702
    %704 = vrot.lane.b32.xlu0 %v693, 123
    %v705 = vpop.permute.xlu0 %704
    %706 = vrot.lane.b32.xlu0 %v636, 12
    %v707 = vpop.permute.xlu0 %706
    %v709 = vsel %vm160, %v703, 0
    %v711 = vsel %vm160, %v705, 0
    %v714 = vsel %vm167, %v699, 0
    %716 = vmatprep.subr.mxu0 0.0
    %717 = vmatpush1.msra.mxu0 0.0
    %718 = vmatprep.subr.mxu0 0.0
    %719 = vmatpush1.msra.mxu0 0.0
    %720 = vmatprep.subr.mxu0 0.0
    %721 = vmatpush1.msra.mxu0 0.0
    %722 = vmatprep.subr.mxu0 0.0
    %723 = vmatpush1.msra.mxu0 0.0
    %724 = vmatprep.subr.mxu0 0.0
    %725 = vmatpush1.msra.mxu0 0.0
    %726 = vmatprep.subr.mxu0 0.0
    %727 = vmatpush1.msra.mxu0 0.0
    %728 = vmatprep.subr.mxu0 0.0
    %729 = vmatpush1.msra.mxu0 0.0
    %730 = vmatprep.subr.mxu0 0.0
    %731 = vmatpush1.msra.mxu0 0.0
    %732 = vmatprep.subr.mxu0 0.0
    %733 = vmatpush1.msra.mxu0 0.0
    %734 = vmatprep.subr.mxu0 0.0
    %735 = vmatpush1.msra.mxu0 0.0
    %736 = vmatprep.subr.mxu0 0.0
    %737 = vmatpush1.msra.mxu0 0.0
    %738 = vmatprep.subr.mxu0 0.0
    %739 = vmatpush1.msra.mxu0 %v714
    %740 = vmatprep.subr.mxu0 0.0
    %741 = vmatpush1.msra.mxu0 %v698
    %742 = vmatprep.subr.mxu0 0.0
    %743 = vmatpush1.msra.mxu0 %v697
    %744 = vmatprep.subr.mxu0 0.0
    %745 = vmatpush1.msra.mxu0 %v696
    %746 = vmatprep.subr.mxu0 0.0
    %747 = vmatpush1.msra.mxu0 %v695
    %748 = vmatprep.subr.mxu0 0.0
    %749 = vmatpush2.msra.mxu0 0.0
    %750 = vmatprep.subr.mxu0 0.0
    %751 = vmatpush2.msra.mxu0 0.0
    %752 = vmatprep.subr.mxu0 0.0
    %753 = vmatpush2.msra.mxu0 0.0
    %754 = vmatprep.subr.mxu0 0.0
    %755 = vmatpush2.msra.mxu0 0.0
    %756 = vmatprep.subr.mxu0 0.0
    %757 = vmatpush2.msra.mxu0 0.0
    %758 = vmatprep.subr.mxu0 0.0
    %759 = vmatpush2.msra.mxu0 0.0
    %760 = vmatprep.subr.mxu0 0.0
    %761 = vmatpush2.msra.mxu0 0.0
    %762 = vmatprep.subr.mxu0 0.0
    %763 = vmatpush2.msra.mxu0 0.0
    %764 = vmatprep.subr.mxu0 0.0
    %765 = vmatpush2.msra.mxu0 0.0
    %766 = vmatprep.subr.mxu0 0.0
    %767 = vmatpush2.msra.mxu0 0.0
    %768 = vmatprep.subr.mxu0 0.0
    %769 = vmatpush2.msra.mxu0 0.0
    %770 = vmatprep.subr.mxu0 0.0
    %771 = vmatpush2.msra.mxu0 0.0
    %772 = vmatprep.subr.mxu0 0.0
    %773 = vmatpush2.msra.mxu0 0.0
    %774 = vmatprep.subr.mxu0 0.0
    %775 = vmatpush2.msra.mxu0 0.0
    %776 = vmatprep.subr.mxu0 0.0
    %777 = vmatpush2.msra.mxu0 0.0
    %778 = vmatprep.subr.mxu0 0.0
    %779 = vmatpush2.msra.mxu0 0.0
    %780 = vmatprep.mubr.f32.mxu0 0.0
    %781 = vmatmul.mubr.f32.gmra.mxu0 %v709
    %v782 = vpop.f32.mrf.mxu0
    %v783 = vadd.f32 %v707, %v782
    %v784 = vpop.f32.mrf.mxu0
    %785 = vmatprep.mubr.f32.mxu0 0.0
    %786 = vmatmul.mubr.f32.gmra.mxu0 %v711
    %v787 = vpop.f32.mrf.mxu0
    %v788 = vadd.f32 %v707, %v787
    %v789 = vpop.f32.mrf.mxu0
    %790 = vdwg.mxu0
    %v791 = vadd.f32 %v405, %v638
    %v792 = vadd.f32 %v406, %v639
    %v793 = vadd.f32 %v407, %v783
    %v794 = vadd.f32 %v408, %v788
    %v795 = vsel %vm409, %v638, -inf
    %796 = vmax.xlane.f32.xlu0 %v795
    %v797 = vpop.xlane.xlu0 %796
    %v798 = vsel %vm409, %v639, -inf
    %799 = vmax.xlane.f32.xlu0 %v798
    %v800 = vpop.xlane.xlu0 %799
    %v801 = vsub.f32 %v638, %v797
    %v802 = vsub.f32 %v639, %v800
    %v803 = vmul.f32 %v801, 1.442695
    %v804 = vpow.pop %v803
    %v805 = vmul.f32 %v802, 1.442695
    %v806 = vpow.pop %v805
    %v807 = vsel %vm409, %v804, 0.0
    %808 = vadd.xlane.f32.xlu0 %v807
    %v809 = vpop.xlane.xlu0 %808
    %v810 = vsel %vm409, %v806, 0.0
    %811 = vadd.xlane.f32.xlu0 %v810
    %v812 = vpop.xlane.xlu0 %811
    %v813 = vlog2.pop %v809
    %v814 = vmul.f32 %v813, 0.6931472
    %v815 = vlog2.pop %v812
    %v816 = vmul.f32 %v815, 0.6931472
    %v817 = vsub.f32 %v801, %v814
    %v818 = vsub.f32 %v802, %v816
    %v819 = vsel %vm409, %v783, -inf
    %820 = vmax.xlane.f32.xlu0 %v819
    %v821 = vpop.xlane.xlu0 %820
    %v822 = vsel %vm409, %v788, -inf
    %823 = vmax.xlane.f32.xlu0 %v822
    %v824 = vpop.xlane.xlu0 %823
    %v825 = vsub.f32 %v783, %v821
    %v826 = vsub.f32 %v788, %v824
    %v827 = vmul.f32 %v825, 1.442695
    %v828 = vpow.pop %v827
    %v829 = vmul.f32 %v826, 1.442695
    %v830 = vpow.pop %v829
    %v831 = vsel %vm409, %v828, 0.0
    %832 = vadd.xlane.f32.xlu0 %v831
    %v833 = vpop.xlane.xlu0 %832
    %v834 = vsel %vm409, %v830, 0.0
    %835 = vadd.xlane.f32.xlu0 %v834
    %v836 = vpop.xlane.xlu0 %835
    %v837 = vlog2.pop %v833
    %v838 = vmul.f32 %v837, 0.6931472
    %v839 = vlog2.pop %v836
    %v840 = vmul.f32 %v839, 0.6931472
    %v841 = vsub.f32 %v825, %v838
    %v842 = vsub.f32 %v826, %v840
    %v843 = vmul.f32 %v817, %v69
    %v844 = vmul.f32 %v818, %v70
    %v845 = vsel %vm409, %v843, 0.0
    %846 = vadd.xlane.f32.xlu0 %v845
    %v847 = vpop.xlane.xlu0 %846
    %v848 = vsel %vm409, %v844, 0.0
    %849 = vadd.xlane.f32.xlu0 %v848
    %v850 = vpop.xlane.xlu0 %849
    %v851 = vsub.f32 0.0, %v847
    %v852 = vsub.f32 0.0, %v850
    %v853 = vmul.f32 %v851, %v91
    %v854 = vmul.f32 %v852, %v92
    %857 = vrot.lane.b32.xlu0 %v853, 126
    %v858 = vpop.permute.xlu0 %857
    %859 = vrot.lane.b32.xlu0 %v854, 126
    %v860 = vpop.permute.xlu0 %859
    %v863 = vsel %vm109, %v858, 0.0
    %v864 = vsel %vm109, %v860, 0.0
    %v865 = vadd.f32 %v863, %v864
    %866 = vadd.xlane.f32.xlu0 %v865
    %v867 = vpop.xlane.xlu0 %866
    %v868 = vrot.slane %v867, 4
    %v869 = vadd.f32 %v867, %v868
    %v870 = vrot.slane %v869, 2
    %v871 = vadd.f32 %v869, %v870
    %v872 = vrot.slane %v871, 1
    %v873 = vadd.f32 %v871, %v872
    %s874 = vtos %v873
    %s875 = smul.f32 %s874, %s125
    %v876 = vmul.f32 %v841, %v81
    %v877 = vmul.f32 %v842, %v82
    %v878 = vsel %vm409, %v876, 0.0
    %879 = vadd.xlane.f32.xlu0 %v878
    %v880 = vpop.xlane.xlu0 %879
    %v881 = vsel %vm409, %v877, 0.0
    %882 = vadd.xlane.f32.xlu0 %v881
    %v883 = vpop.xlane.xlu0 %882
    %v884 = vsub.f32 0.0, %v880
    %v885 = vsub.f32 0.0, %v883
    %v886 = vmul.f32 %v884, %v99
    %v887 = vmul.f32 %v885, %v100
    %890 = vrot.lane.b32.xlu0 %v886, 126
    %v891 = vpop.permute.xlu0 %890
    %892 = vrot.lane.b32.xlu0 %v887, 126
    %v893 = vpop.permute.xlu0 %892
    %v896 = vsel %vm109, %v891, 0.0
    %v897 = vsel %vm109, %v893, 0.0
    %v898 = vadd.f32 %v896, %v897
    %899 = vadd.xlane.f32.xlu0 %v898
    %v900 = vpop.xlane.xlu0 %899
    %v901 = vrot.slane %v900, 4
    %v902 = vadd.f32 %v900, %v901
    %v903 = vrot.slane %v902, 2
    %v904 = vadd.f32 %v902, %v903
    %v905 = vrot.slane %v904, 1
    %v906 = vadd.f32 %v904, %v905
    %s907 = vtos %v906
    %s908 = smul.f32 %s907, %s149
    %s909 = sadd.f32 %s875, %s908
    %s910 = smul.f32 %s909, 0.5
    %s911 = sadd.f32 %s526, %s910
    %v912 = vmul.f32 %v817, 1.442695
    %v913 = vpow.pop %v912
    %v914 = vmul.f32 %v818, 1.442695
    %v915 = vpow.pop %v914
    %v916 = vmul.f32 %v841, 1.442695
    %v917 = vpow.pop %v916
    %v918 = vmul.f32 %v842, 1.442695
    %v919 = vpow.pop %v918
    %s920 = smul.f32 %s911, 0.5
    %923 = vrot.lane.b32.xlu0 %v793, 5
    %v924 = vpop.permute.xlu0 %923
    %925 = vrot.lane.b32.xlu0 %v794, 5
    %v926 = vpop.permute.xlu0 %925
    %v929 = vsel %vm409, %v791, %v924
    %v930 = vsel %vm409, %v792, %v926
    %v931 = vmul.f32 %v929, 0.5
    %v932 = vmul.f32 %v930, 0.5
    %vm933 = vcmask 80896
    %934 = vst.msk [vmem:[%s6] sm:$0xff] %vm933, %v931
    %935 = vst.msk [vmem:[%s6 + $0x8] sm:$0xff] %vm933, %v932
    %v936 = vadd.f32 %v528, 0.0
    %v937 = vadd.f32 %v530, 0.0
    %v938 = vadd.f32 %v936, %v913
    %v939 = vadd.f32 %v937, %v915
    %v940 = vmul.f32 %v938, 0.5
    %v941 = vmul.f32 %v939, 0.5
    %v942 = vadd.f32 %v532, 0.0
    %v943 = vadd.f32 %v534, 0.0
    %v944 = vadd.f32 %v942, %v917
    %v945 = vadd.f32 %v943, %v919
    %v946 = vmul.f32 %v944, 0.5
    %v947 = vmul.f32 %v945, 0.5
    %v948 = vsub.f32 %v940, %v528
    %v949 = vsub.f32 %v941, %v530
    %v950 = vmul.f32 %v948, %v948
    %v951 = vmul.f32 %v949, %v949
    %v952 = vsel %vm409, %v950, 0.0
    %953 = vadd.xlane.f32.xlu0 %v952
    %v954 = vpop.xlane.xlu0 %953
    %v955 = vsel %vm409, %v951, 0.0
    %956 = vadd.xlane.f32.xlu0 %v955
    %v957 = vpop.xlane.xlu0 %956
    %v958 = vadd.f32 %v954, 0.0
    %v959 = vadd.f32 %v957, 0.0
    %v960 = vsub.f32 %v940, %v913
    %v961 = vsub.f32 %v941, %v915
    %v962 = vmul.f32 %v960, %v960
    %v963 = vmul.f32 %v961, %v961
    %v964 = vsel %vm409, %v962, 0.0
    %965 = vadd.xlane.f32.xlu0 %v964
    %v966 = vpop.xlane.xlu0 %965
    %v967 = vsel %vm409, %v963, 0.0
    %968 = vadd.xlane.f32.xlu0 %v967
    %v969 = vpop.xlane.xlu0 %968
    %v970 = vadd.f32 %v958, %v966
    %v971 = vadd.f32 %v959, %v969
    %v972 = vmul.f32 %v970, 0.5
    %v973 = vmul.f32 %v971, 0.5
    %v974 = vsub.f32 %v946, %v532
    %v975 = vsub.f32 %v947, %v534
    %v976 = vmul.f32 %v974, %v974
    %v977 = vmul.f32 %v975, %v975
    %v978 = vsel %vm409, %v976, 0.0
    %979 = vadd.xlane.f32.xlu0 %v978
    %v980 = vpop.xlane.xlu0 %979
    %v981 = vsel %vm409, %v977, 0.0
    %982 = vadd.xlane.f32.xlu0 %v981
    %v983 = vpop.xlane.xlu0 %982
    %v984 = vadd.f32 %v980, 0.0
    %v985 = vadd.f32 %v983, 0.0
    %v986 = vsub.f32 %v946, %v917
    %v987 = vsub.f32 %v947, %v919
    %v988 = vmul.f32 %v986, %v986
    %v989 = vmul.f32 %v987, %v987
    %v990 = vsel %vm409, %v988, 0.0
    %991 = vadd.xlane.f32.xlu0 %v990
    %v992 = vpop.xlane.xlu0 %991
    %v993 = vsel %vm409, %v989, 0.0
    %994 = vadd.xlane.f32.xlu0 %v993
    %v995 = vpop.xlane.xlu0 %994
    %v996 = vadd.f32 %v984, %v992
    %v997 = vadd.f32 %v985, %v995
    %v998 = vmul.f32 %v996, 0.5
    %v999 = vmul.f32 %v997, 0.5
    %v1000 = vadd.f32 %v972, %v998
    %v1001 = vadd.f32 %v973, %v999
    %v1002 = vmul.f32 %v1000, 0.5
    %v1003 = vmul.f32 %v1001, 0.5
    %v1004 = vmul.f32 %v1002, %v35
    %v1005 = vmul.f32 %v1003, %v36
    %1008 = vrot.lane.b32.xlu0 %v1004, 125
    %v1009 = vpop.permute.xlu0 %1008
    %1010 = vrot.lane.b32.xlu0 %v1005, 125
    %v1011 = vpop.permute.xlu0 %1010
    %v1014 = vsel %vm109, %v1009, 0.0
    %v1015 = vsel %vm109, %v1011, 0.0
    %v1016 = vadd.f32 %v1014, %v1015
    %1017 = vadd.xlane.f32.xlu0 %v1016
    %v1018 = vpop.xlane.xlu0 %1017
    %v1019 = vrot.slane %v1018, 4
    %v1020 = vadd.f32 %v1018, %v1019
    %v1021 = vrot.slane %v1020, 2
    %v1022 = vadd.f32 %v1020, %v1021
    %v1023 = vrot.slane %v1022, 1
    %v1024 = vadd.f32 %v1022, %v1023
    %s1025 = vtos %v1024
    %1026 = vrot.lane.b32.xlu0 %v35, 125
    %v1027 = vpop.permute.xlu0 %1026
    %1028 = vrot.lane.b32.xlu0 %v36, 125
    %v1029 = vpop.permute.xlu0 %1028
    %v1032 = vsel %vm109, %v1027, 0.0
    %v1033 = vsel %vm109, %v1029, 0.0
    %v1034 = vadd.f32 %v1032, %v1033
    %1035 = vadd.xlane.f32.xlu0 %v1034
    %v1036 = vpop.xlane.xlu0 %1035
    %v1037 = vrot.slane %v1036, 4
    %v1038 = vadd.f32 %v1036, %v1037
    %v1039 = vrot.slane %v1038, 2
    %v1040 = vadd.f32 %v1038, %v1039
    %v1041 = vrot.slane %v1040, 1
    %v1042 = vadd.f32 %v1040, %v1041
    %s1043 = vtos %v1042
    %s1044 = sadd.f32 %s1043, 0.001
    %v1045 = vstv %s1044
    %v1046 = vrcp.pop %v1045
    %s1047 = vtos %v1046
    %s1048 = smul.f32 %s1025, %s1047
    %s1049 = smul.f32 %s1048, 0.5
    %s1050 = sadd.f32 %s920, %s1049
    %s1051 = scalar_lea.smem [#allocation2], 0
    %1052 = sst [smem:[%s1051]] %s1050
    // Predicated region
    $region22: #{create_model_disti_forward.1} parent=1 // pred_check
      _
    $region23: #{create_model_disti_forward.1} parent=1 // pred_check_branch
      %1054 = sbr.rel (0) target = $region25
    $region24: #{create_model_disti_forward.1} parent=1 // pred_region
      %s1056 = ssub.s32 16, 16
      %1057 = vsyncadd [#allocation3], %s1056
      %1060 = dma.smem_to_hbm [#allocation2], 16, %s5, [#allocation3]
    $region25: #{create_model_disti_forward.1} parent=1 // pred_fallthru
      _
    // Predicated region
    $region26: #{create_model_disti_forward.1} parent=1 // pred_check
      _
    $region27: #{create_model_disti_forward.1} parent=1 // pred_check_branch
      %1062 = sbr.rel (0) target = $region29
    $region28: #{create_model_disti_forward.1} parent=1 // pred_region
      _
    $region29: #{create_model_disti_forward.1} parent=1 // pred_fallthru
      _
    // Predicated region
    $region30: #{create_model_disti_forward.1} parent=1 // pred_check
      _
    $region31: #{create_model_disti_forward.1} parent=1 // pred_check_branch
      %1064 = sbr.rel (0) target = $region33
    $region32: #{create_model_disti_forward.1} parent=1 // pred_region
      %1065 = dma.done [#allocation3], 16
    $region33: #{create_model_disti_forward.1} parent=1 // pred_fallthru
      _
    // Predicated region
    $region34: #{create_model_disti_forward.1} parent=1 // pred_check
      _
    $region35: #{create_model_disti_forward.1} parent=1 // pred_check_branch
      %1067 = sbr.rel (0) target = $region37
    $region36: #{create_model_disti_forward.1} parent=1 // pred_region
      _
    $region37: #{create_model_disti_forward.1} parent=1 // pred_fallthru
      _
    %1068 = sfence
    %1069 = vsyncpa [#allocation3], 1

</llo_original>
